<compile_context>
chip_gen: v6e
topology: v6e:2x2x1
jax: 0.10.0
libtpu: 0.0.40
codegen_flags: <defaults>
</compile_context>

<pallas_src>
import jax
import jax.numpy as jnp
import numpy as np
from jax.experimental import pallas as pl
from jax.experimental.pallas import tpu as pltpu


def _make_cbam_kernel(H, W, HW, HWp, ksize, C, Cr, leaky_slope=0.1):
    P = ksize // 2
    NACC = 4  # independent partial sums for the 49-tap accumulation

    def kernel(x_ref, w1t_ref, w2_ref, wtab_ref, o_ref):
        # x_ref:    (1, C, HWp) VMEM   one batch, HW (padded) on lanes
        # w1t_ref:  (C, Cr)     VMEM   transpose of Conv2d(C, Cr, 1) weight
        # w2_ref:   (C, Cr)     VMEM   Conv2d(Cr, C, 1) weight
        # wtab_ref: (2*k*k,HWp) VMEM   rows (2t, 2t+1) = (wm_t, wa_t) * pad-mask_t
        x = x_ref[0].astype(jnp.float32)                       # (C, HWp)

        # ---- channel attention (VPU/XLU only; C stays on sublanes) --------
        if HW != HWp:
            lane = jax.lax.broadcasted_iota(jnp.int32, (1, HWp), 1)
            valid = lane < HW
            mx = jnp.max(jnp.where(valid, x, -jnp.inf), axis=1, keepdims=True)
            sm = jnp.sum(jnp.where(valid, x, 0.0), axis=1, keepdims=True)
        else:
            mx = jnp.max(x, axis=1, keepdims=True)             # (C, 1) global max pool
            sm = jnp.sum(x, axis=1, keepdims=True)
        pooled = jnp.concatenate([mx, sm * (1.0 / HW)], axis=1)  # (C, 2) [max | avg]

        # Tiny MLP (shared weights for both branches) done on VPU + sublane
        # reduces; Cr is a small static constant so the loop is fully unrolled.
        y = jnp.zeros((C, 2), jnp.float32)
        for j in range(Cr):
            w1c = w1t_ref[:, pl.ds(j, 1)].astype(jnp.float32)        # (C, 1)
            hj = jnp.sum(pooled * w1c, axis=0, keepdims=True)        # (1, 2)
            hj = jnp.where(hj > 0, hj, leaky_slope * hj)             # LeakyReLU(0.1)
            y = y + hj * w2_ref[:, pl.ds(j, 1)].astype(jnp.float32)  # (C, 2)
        ch = jax.nn.sigmoid(y[:, 0:1] + y[:, 1:2])             # (C, 1) max+avg branch

        xc = x * ch                                            # (C, HWp)

        # ---- spatial attention --------------------------------------------
        mmap = jnp.max(xc, axis=0, keepdims=True)              # (1, HWp) channel max
        amap = jnp.sum(xc, axis=0, keepdims=True) * (1.0 / C)  # (1, HWp) channel mean
        stacked = jnp.concatenate([mmap, amap], axis=0)        # (2, HWp)

        # Direct 7x7 'same' conv (zero padding): out[p] needs in[p + dy*W + dx].
        # pltpu.roll follows jnp.roll semantics, so roll by (-(dy*W+dx)) mod HWp.
        # Wrapped / out-of-image / padded lanes are zeroed because the weight
        # table already contains weight*mask per tap.
        accs = [jnp.zeros((2, HWp), jnp.float32) for _ in range(NACC)]
        t = 0
        for dy in range(-P, P + 1):
            for dx in range(-P, P + 1):
                shift = (-(dy * W + dx)) % HWp
                rolled = stacked if shift == 0 else pltpu.roll(stacked, shift, axis=1)
                wm_wa = wtab_ref[pl.ds(2 * t, 2), :]           # (2, HWp) masked weights
                accs[t % NACC] = accs[t % NACC] + wm_wa * rolled
                t += 1
        conv2 = (accs[0] + accs[1]) + (accs[2] + accs[3])      # (2, HWp)
        sp = jax.nn.sigmoid(conv2[0:1, :] + conv2[1:2, :])     # (1, HWp)

        o_ref[0] = (xc * sp).astype(o_ref.dtype)

    return kernel


def cbam_forward(x, w1, w2, w_sp):
    """x: (B, C, H, W) NCHW.  w1: (C//r, C).  w2: (C, C//r).  w_sp: (1, 2, k, k)."""
    B, C, H, W = x.shape
    Cr = w1.shape[0]
    HW = H * W
    k = w_sp.shape[-1]
    P = k // 2
    HWp = max(128, ((HW + 127) // 128) * 128)                  # lane-dense pad

    xf = x.reshape(B, C, HW)
    if HWp != HW:
        xf = jnp.pad(xf, ((0, 0), (0, 0), (0, HWp - HW)))

    # Per-tap masked weight table: rows (2t, 2t+1) = (wm_t, wa_t) * mask_t,
    # where mask_t zeroes taps that fall outside the HxW image (zero padding)
    # and lanes beyond HW.  Mask geometry is static -> built with numpy.
    offs = [(dy, dx) for dy in range(-P, P + 1) for dx in range(-P, P + 1)]
    dy_a = np.array([o[0] for o in offs], np.int32)[:, None]   # (k*k, 1)
    dx_a = np.array([o[1] for o in offs], np.int32)[:, None]
    lane = np.arange(HWp, dtype=np.int32)[None, :]             # (1, HWp)
    row = lane // W
    col = lane % W
    mask_np = ((row + dy_a >= 0) & (row + dy_a < H) &
               (col + dx_a >= 0) & (col + dx_a < W) & (lane < HW))   # (k*k, HWp)
    mask = jnp.asarray(mask_np, jnp.float32)
    wflat = w_sp.reshape(2, k * k).astype(jnp.float32)         # row0=max ch, row1=mean ch
    wtab = (wflat.T[:, :, None] * mask[:, None, :]).reshape(2 * k * k, HWp)

    w1t = jnp.transpose(w1).astype(jnp.float32)                # (C, Cr)
    w2f = w2.astype(jnp.float32)                               # (C, Cr)

    out = pl.pallas_call(
        _make_cbam_kernel(H, W, HW, HWp, k, C, Cr),
        out_shape=jax.ShapeDtypeStruct((B, C, HWp), x.dtype),
        grid=(B,),
        in_specs=[
            pl.BlockSpec((1, C, HWp), lambda b: (b, 0, 0)),        # x (per-batch block)
            pl.BlockSpec((C, Cr), lambda b: (0, 0)),               # w1^T
            pl.BlockSpec((C, Cr), lambda b: (0, 0)),               # w2
            pl.BlockSpec((2 * k * k, HWp), lambda b: (0, 0)),      # masked 7x7 weights
        ],
        out_specs=pl.BlockSpec((1, C, HWp), lambda b: (b, 0, 0)),
        compiler_params=pltpu.CompilerParams(
            dimension_semantics=("parallel",)),                    # shard B over TCs (v7x)
    )(xf, w1t, w2f, wtab)

    if HWp != HW:
        out = out[:, :, :HW]
    return out.reshape(B, C, H, W)


def cbam_ref(x, w1, w2, w_sp):
    """Pure-JAX reference matching the PyTorch forward."""
    mx = x.max(axis=(2, 3), keepdims=True)
    av = x.mean(axis=(2, 3), keepdims=True)

    def mlp(v):  # (B, C, 1, 1)
        h = jnp.einsum('rc,bcij->brij', w1, v)
        h = jnp.where(h > 0, h, 0.1 * h)
        return jnp.einsum('cr,brij->bcij', w2, h)

    ch = jax.nn.sigmoid(mlp(mx) + mlp(av))
    xc = ch * x
    mm = xc.max(axis=1, keepdims=True)
    am = xc.mean(axis=1, keepdims=True)
    cat = jnp.concatenate([mm, am], axis=1)
    conv = jax.lax.conv_general_dilated(
        cat, w_sp, window_strides=(1, 1), padding='SAME',
        dimension_numbers=('NCHW', 'OIHW', 'NCHW'))
    sp = jax.nn.sigmoid(conv)
    return sp * xc


if __name__ == "__main__":
    B, C, H, W = 2, 32, 16, 16
    reduction, spatial_kernel = 16, 7
    Cr = C // reduction

    key = jax.random.PRNGKey(0)
    k1, k2, k3, kx = jax.random.split(key, 4)
    w1 = jax.random.normal(k1, (Cr, C), jnp.float32) * 0.1      # Conv2d(C, C//r, 1, bias=False)
    w2 = jax.random.normal(k2, (C, Cr), jnp.float32) * 0.1      # Conv2d(C//r, C, 1, bias=False)
    w_sp = jax.random.normal(k3, (1, 2, spatial_kernel, spatial_kernel),
                             jnp.float32) * 0.1                 # Conv2d(2, 1, 7, pad=3, bias=False)
    x = jax.random.normal(kx, (B, C, H, W), jnp.float32)

    fwd = jax.jit(cbam_forward)
    out = jax.block_until_ready(fwd(x, w1, w2, w_sp))

    ref = jax.block_until_ready(cbam_ref(x, w1, w2, w_sp))
    np.testing.assert_allclose(np.asarray(out), np.asarray(ref), rtol=2e-3, atol=2e-3)

    print("KERNEL_OK")
</pallas_src>

<mosaic_0001>
module attributes {stable_mosaic.version = 11 : i64} {
  func.func @kernel(%arg0: i32, %arg1: memref<1x32x256xf32, #tpu.memory_space<vmem>>, %arg2: memref<32x2xf32, #tpu.memory_space<vmem>>, %arg3: memref<32x2xf32, #tpu.memory_space<vmem>>, %arg4: memref<98x256xf32, #tpu.memory_space<vmem>>, %arg5: memref<1x32x256xf32, #tpu.memory_space<vmem>>) attributes {dimension_semantics = [#tpu.dimension_semantics<parallel>], iteration_bounds = array<i64: 2>, scalar_prefetch = 0 : i64, scratch_operands = 0 : i64, tpu.core_type = #tpu.core_type<tc>, window_params = [{transform_indices = @transform_0, window_bounds = array<i64: 1, 32, 256>}, {pipeline_mode = #tpu.pipeline_mode<synchronous>, transform_indices = @transform_1, window_bounds = array<i64: 32, 2>}, {pipeline_mode = #tpu.pipeline_mode<synchronous>, transform_indices = @transform_2, window_bounds = array<i64: 32, 2>}, {pipeline_mode = #tpu.pipeline_mode<synchronous>, transform_indices = @transform_3, window_bounds = array<i64: 98, 256>}, {transform_indices = @transform_4, window_bounds = array<i64: 1, 32, 256>}]} {
    %c0 = arith.constant 0 : index
    %c0_0 = arith.constant 0 : index
    %c0_1 = arith.constant 0 : index
    %0 = vector.load %arg1[%c0, %c0_0, %c0_1] : memref<1x32x256xf32, #tpu.memory_space<vmem>>, vector<1x32x256xf32>
    %1 = vector.shape_cast %0 : vector<1x32x256xf32> to vector<32x256xf32>
    %cst = arith.constant dense<0xFF800000> : vector<32xf32>
    %2 = vector.multi_reduction <maximumf>, %1, %cst [1] : vector<32x256xf32> to vector<32xf32>
    %3 = vector.shape_cast %2 : vector<32xf32> to vector<32x1xf32>
    %cst_2 = arith.constant dense<0.000000e+00> : vector<32xf32>
    %4 = vector.multi_reduction <add>, %1, %cst_2 [1] : vector<32x256xf32> to vector<32xf32>
    %5 = vector.shape_cast %4 : vector<32xf32> to vector<32x1xf32>
    %cst_3 = arith.constant 3.906250e-03 : f32
    %6 = vector.broadcast %cst_3 : f32 to vector<32x1xf32>
    %7 = arith.mulf %5, %6 : vector<32x1xf32>
    %8 = tpu.concatenate %3, %7 in 1 : vector<32x1xf32>, vector<32x1xf32> -> vector<32x2xf32>
    %cst_4 = arith.constant 0.000000e+00 : f32
    %9 = vector.broadcast %cst_4 : f32 to vector<32x2xf32>
    %c0_5 = arith.constant 0 : index
    %c0_6 = arith.constant 0 : index
    %10 = vector.load %arg2[%c0_5, %c0_6] : memref<32x2xf32, #tpu.memory_space<vmem>>, vector<32x1xf32>
    %11 = vector.broadcast %10 : vector<32x1xf32> to vector<32x2xf32>
    %12 = arith.mulf %8, %11 : vector<32x2xf32>
    %cst_7 = arith.constant dense<0.000000e+00> : vector<2xf32>
    %13 = vector.multi_reduction <add>, %12, %cst_7 [0] : vector<32x2xf32> to vector<2xf32>
    %14 = vector.shape_cast %13 : vector<2xf32> to vector<1x2xf32>
    %cst_8 = arith.constant 0.000000e+00 : f32
    %15 = vector.broadcast %cst_8 : f32 to vector<1x2xf32>
    %16 = arith.cmpf ogt, %14, %15 : vector<1x2xf32>
    %cst_9 = arith.constant 1.000000e-01 : f32
    %17 = vector.broadcast %cst_9 : f32 to vector<1x2xf32>
    %18 = arith.mulf %17, %14 : vector<1x2xf32>
    %19 = arith.select %16, %14, %18 : vector<1x2xi1>, vector<1x2xf32>
    %c0_10 = arith.constant 0 : index
    %c0_11 = arith.constant 0 : index
    %20 = vector.load %arg3[%c0_10, %c0_11] : memref<32x2xf32, #tpu.memory_space<vmem>>, vector<32x1xf32>
    %21 = vector.broadcast %19 : vector<1x2xf32> to vector<32x2xf32>
    %22 = vector.broadcast %20 : vector<32x1xf32> to vector<32x2xf32>
    %23 = arith.mulf %21, %22 : vector<32x2xf32>
    %24 = arith.addf %9, %23 : vector<32x2xf32>
    %c0_12 = arith.constant 0 : index
    %c1 = arith.constant 1 : index
    %25 = vector.load %arg2[%c0_12, %c1] : memref<32x2xf32, #tpu.memory_space<vmem>>, vector<32x1xf32>
    %26 = vector.broadcast %25 : vector<32x1xf32> to vector<32x2xf32>
    %27 = arith.mulf %8, %26 : vector<32x2xf32>
    %cst_13 = arith.constant dense<0.000000e+00> : vector<2xf32>
    %28 = vector.multi_reduction <add>, %27, %cst_13 [0] : vector<32x2xf32> to vector<2xf32>
    %29 = vector.shape_cast %28 : vector<2xf32> to vector<1x2xf32>
    %cst_14 = arith.constant 0.000000e+00 : f32
    %30 = vector.broadcast %cst_14 : f32 to vector<1x2xf32>
    %31 = arith.cmpf ogt, %29, %30 : vector<1x2xf32>
    %cst_15 = arith.constant 1.000000e-01 : f32
    %32 = vector.broadcast %cst_15 : f32 to vector<1x2xf32>
    %33 = arith.mulf %32, %29 : vector<1x2xf32>
    %34 = arith.select %31, %29, %33 : vector<1x2xi1>, vector<1x2xf32>
    %c0_16 = arith.constant 0 : index
    %c1_17 = arith.constant 1 : index
    %35 = vector.load %arg3[%c0_16, %c1_17] : memref<32x2xf32, #tpu.memory_space<vmem>>, vector<32x1xf32>
    %36 = vector.broadcast %34 : vector<1x2xf32> to vector<32x2xf32>
    %37 = vector.broadcast %35 : vector<32x1xf32> to vector<32x2xf32>
    %38 = arith.mulf %36, %37 : vector<32x2xf32>
    %39 = arith.addf %24, %38 : vector<32x2xf32>
    %40 = vector.extract_strided_slice %39 {offsets = [0, 0], sizes = [32, 1], strides = [1, 1]} : vector<32x2xf32> to vector<32x1xf32>
    %41 = vector.extract_strided_slice %39 {offsets = [0, 1], sizes = [32, 1], strides = [1, 1]} : vector<32x2xf32> to vector<32x1xf32>
    %42 = arith.addf %40, %41 : vector<32x1xf32>
    %43 = arith.negf %42 : vector<32x1xf32>
    %44 = math.exp %43 : vector<32x1xf32>
    %cst_18 = arith.constant 1.000000e+00 : f32
    %45 = vector.broadcast %cst_18 : f32 to vector<32x1xf32>
    %46 = arith.addf %45, %44 : vector<32x1xf32>
    %47 = arith.divf %45, %46 : vector<32x1xf32>
    %48 = vector.broadcast %47 : vector<32x1xf32> to vector<32x256xf32>
    %49 = arith.mulf %1, %48 : vector<32x256xf32>
    %cst_19 = arith.constant dense<0xFF800000> : vector<256xf32>
    %50 = vector.multi_reduction <maximumf>, %49, %cst_19 [0] : vector<32x256xf32> to vector<256xf32>
    %51 = vector.shape_cast %50 : vector<256xf32> to vector<1x256xf32>
    %cst_20 = arith.constant dense<0.000000e+00> : vector<256xf32>
    %52 = vector.multi_reduction <add>, %49, %cst_20 [0] : vector<32x256xf32> to vector<256xf32>
    %53 = vector.shape_cast %52 : vector<256xf32> to vector<1x256xf32>
    %cst_21 = arith.constant 3.125000e-02 : f32
    %54 = vector.broadcast %cst_21 : f32 to vector<1x256xf32>
    %55 = arith.mulf %53, %54 : vector<1x256xf32>
    %56 = tpu.concatenate %51, %55 in 0 : vector<1x256xf32>, vector<1x256xf32> -> vector<2x256xf32>
    %cst_22 = arith.constant 0.000000e+00 : f32
    %57 = vector.broadcast %cst_22 : f32 to vector<2x256xf32>
    %cst_23 = arith.constant 0.000000e+00 : f32
    %58 = vector.broadcast %cst_23 : f32 to vector<2x256xf32>
    %cst_24 = arith.constant 0.000000e+00 : f32
    %59 = vector.broadcast %cst_24 : f32 to vector<2x256xf32>
    %cst_25 = arith.constant 0.000000e+00 : f32
    %60 = vector.broadcast %cst_25 : f32 to vector<2x256xf32>
    %c51_i32 = arith.constant 51 : i32
    %61 = tpu.dynamic_rotate %56 by %c51_i32 dim 1 : vector<2x256xf32>, i32 -> vector<2x256xf32>
    %c0_26 = arith.constant 0 : index
    %c0_27 = arith.constant 0 : index
    %62 = vector.load %arg4[%c0_26, %c0_27] : memref<98x256xf32, #tpu.memory_space<vmem>>, vector<2x256xf32>
    %63 = arith.mulf %62, %61 : vector<2x256xf32>
    %64 = arith.addf %57, %63 : vector<2x256xf32>
    %c50_i32 = arith.constant 50 : i32
    %65 = tpu.dynamic_rotate %56 by %c50_i32 dim 1 : vector<2x256xf32>, i32 -> vector<2x256xf32>
    %c2 = arith.constant 2 : index
    %c0_28 = arith.constant 0 : index
    %66 = vector.load %arg4[%c2, %c0_28] : memref<98x256xf32, #tpu.memory_space<vmem>>, vector<2x256xf32>
    %67 = arith.mulf %66, %65 : vector<2x256xf32>
    %68 = arith.addf %58, %67 : vector<2x256xf32>
    %c49_i32 = arith.constant 49 : i32
    %69 = tpu.dynamic_rotate %56 by %c49_i32 dim 1 : vector<2x256xf32>, i32 -> vector<2x256xf32>
    %c4 = arith.constant 4 : index
    %c0_29 = arith.constant 0 : index
    %70 = vector.load %arg4[%c4, %c0_29] : memref<98x256xf32, #tpu.memory_space<vmem>>, vector<2x256xf32>
    %71 = arith.mulf %70, %69 : vector<2x256xf32>
    %72 = arith.addf %59, %71 : vector<2x256xf32>
    %c48_i32 = arith.constant 48 : i32
    %73 = tpu.dynamic_rotate %56 by %c48_i32 dim 1 : vector<2x256xf32>, i32 -> vector<2x256xf32>
    %c6 = arith.constant 6 : index
    %c0_30 = arith.constant 0 : index
    %74 = vector.load %arg4[%c6, %c0_30] : memref<98x256xf32, #tpu.memory_space<vmem>>, vector<2x256xf32>
    %75 = arith.mulf %74, %73 : vector<2x256xf32>
    %76 = arith.addf %60, %75 : vector<2x256xf32>
    %c47_i32 = arith.constant 47 : i32
    %77 = tpu.dynamic_rotate %56 by %c47_i32 dim 1 : vector<2x256xf32>, i32 -> vector<2x256xf32>
    %c8 = arith.constant 8 : index
    %c0_31 = arith.constant 0 : index
    %78 = vector.load %arg4[%c8, %c0_31] : memref<98x256xf32, #tpu.memory_space<vmem>>, vector<2x256xf32>
    %79 = arith.mulf %78, %77 : vector<2x256xf32>
    %80 = arith.addf %64, %79 : vector<2x256xf32>
    %c46_i32 = arith.constant 46 : i32
    %81 = tpu.dynamic_rotate %56 by %c46_i32 dim 1 : vector<2x256xf32>, i32 -> vector<2x256xf32>
    %c10 = arith.constant 10 : index
    %c0_32 = arith.constant 0 : index
    %82 = vector.load %arg4[%c10, %c0_32] : memref<98x256xf32, #tpu.memory_space<vmem>>, vector<2x256xf32>
    %83 = arith.mulf %82, %81 : vector<2x256xf32>
    %84 = arith.addf %68, %83 : vector<2x256xf32>
    %c45_i32 = arith.constant 45 : i32
    %85 = tpu.dynamic_rotate %56 by %c45_i32 dim 1 : vector<2x256xf32>, i32 -> vector<2x256xf32>
    %c12 = arith.constant 12 : index
    %c0_33 = arith.constant 0 : index
    %86 = vector.load %arg4[%c12, %c0_33] : memref<98x256xf32, #tpu.memory_space<vmem>>, vector<2x256xf32>
    %87 = arith.mulf %86, %85 : vector<2x256xf32>
    %88 = arith.addf %72, %87 : vector<2x256xf32>
    %c35_i32 = arith.constant 35 : i32
    %89 = tpu.dynamic_rotate %56 by %c35_i32 dim 1 : vector<2x256xf32>, i32 -> vector<2x256xf32>
    %c14 = arith.constant 14 : index
    %c0_34 = arith.constant 0 : index
    %90 = vector.load %arg4[%c14, %c0_34] : memref<98x256xf32, #tpu.memory_space<vmem>>, vector<2x256xf32>
    %91 = arith.mulf %90, %89 : vector<2x256xf32>
    %92 = arith.addf %76, %91 : vector<2x256xf32>
    %c34_i32 = arith.constant 34 : i32
    %93 = tpu.dynamic_rotate %56 by %c34_i32 dim 1 : vector<2x256xf32>, i32 -> vector<2x256xf32>
    %c16 = arith.constant 16 : index
    %c0_35 = arith.constant 0 : index
    %94 = vector.load %arg4[%c16, %c0_35] : memref<98x256xf32, #tpu.memory_space<vmem>>, vector<2x256xf32>
    %95 = arith.mulf %94, %93 : vector<2x256xf32>
    %96 = arith.addf %80, %95 : vector<2x256xf32>
    %c33_i32 = arith.constant 33 : i32
    %97 = tpu.dynamic_rotate %56 by %c33_i32 dim 1 : vector<2x256xf32>, i32 -> vector<2x256xf32>
    %c18 = arith.constant 18 : index
    %c0_36 = arith.constant 0 : index
    %98 = vector.load %arg4[%c18, %c0_36] : memref<98x256xf32, #tpu.memory_space<vmem>>, vector<2x256xf32>
    %99 = arith.mulf %98, %97 : vector<2x256xf32>
    %100 = arith.addf %84, %99 : vector<2x256xf32>
    %c32_i32 = arith.constant 32 : i32
    %101 = tpu.dynamic_rotate %56 by %c32_i32 dim 1 : vector<2x256xf32>, i32 -> vector<2x256xf32>
    %c20 = arith.constant 20 : index
    %c0_37 = arith.constant 0 : index
    %102 = vector.load %arg4[%c20, %c0_37] : memref<98x256xf32, #tpu.memory_space<vmem>>, vector<2x256xf32>
    %103 = arith.mulf %102, %101 : vector<2x256xf32>
    %104 = arith.addf %88, %103 : vector<2x256xf32>
    %c31_i32 = arith.constant 31 : i32
    %105 = tpu.dynamic_rotate %56 by %c31_i32 dim 1 : vector<2x256xf32>, i32 -> vector<2x256xf32>
    %c22 = arith.constant 22 : index
    %c0_38 = arith.constant 0 : index
    %106 = vector.load %arg4[%c22, %c0_38] : memref<98x256xf32, #tpu.memory_space<vmem>>, vector<2x256xf32>
    %107 = arith.mulf %106, %105 : vector<2x256xf32>
    %108 = arith.addf %92, %107 : vector<2x256xf32>
    %c30_i32 = arith.constant 30 : i32
    %109 = tpu.dynamic_rotate %56 by %c30_i32 dim 1 : vector<2x256xf32>, i32 -> vector<2x256xf32>
    %c24 = arith.constant 24 : index
    %c0_39 = arith.constant 0 : index
    %110 = vector.load %arg4[%c24, %c0_39] : memref<98x256xf32, #tpu.memory_space<vmem>>, vector<2x256xf32>
    %111 = arith.mulf %110, %109 : vector<2x256xf32>
    %112 = arith.addf %96, %111 : vector<2x256xf32>
    %c29_i32 = arith.constant 29 : i32
    %113 = tpu.dynamic_rotate %56 by %c29_i32 dim 1 : vector<2x256xf32>, i32 -> vector<2x256xf32>
    %c26 = arith.constant 26 : index
    %c0_40 = arith.constant 0 : index
    %114 = vector.load %arg4[%c26, %c0_40] : memref<98x256xf32, #tpu.memory_space<vmem>>, vector<2x256xf32>
    %115 = arith.mulf %114, %113 : vector<2x256xf32>
    %116 = arith.addf %100, %115 : vector<2x256xf32>
    %c19_i32 = arith.constant 19 : i32
    %117 = tpu.dynamic_rotate %56 by %c19_i32 dim 1 : vector<2x256xf32>, i32 -> vector<2x256xf32>
    %c28 = arith.constant 28 : index
    %c0_41 = arith.constant 0 : index
    %118 = vector.load %arg4[%c28, %c0_41] : memref<98x256xf32, #tpu.memory_space<vmem>>, vector<2x256xf32>
    %119 = arith.mulf %118, %117 : vector<2x256xf32>
    %120 = arith.addf %104, %119 : vector<2x256xf32>
    %c18_i32 = arith.constant 18 : i32
    %121 = tpu.dynamic_rotate %56 by %c18_i32 dim 1 : vector<2x256xf32>, i32 -> vector<2x256xf32>
    %c30 = arith.constant 30 : index
    %c0_42 = arith.constant 0 : index
    %122 = vector.load %arg4[%c30, %c0_42] : memref<98x256xf32, #tpu.memory_space<vmem>>, vector<2x256xf32>
    %123 = arith.mulf %122, %121 : vector<2x256xf32>
    %124 = arith.addf %108, %123 : vector<2x256xf32>
    %c17_i32 = arith.constant 17 : i32
    %125 = tpu.dynamic_rotate %56 by %c17_i32 dim 1 : vector<2x256xf32>, i32 -> vector<2x256xf32>
    %c32 = arith.constant 32 : index
    %c0_43 = arith.constant 0 : index
    %126 = vector.load %arg4[%c32, %c0_43] : memref<98x256xf32, #tpu.memory_space<vmem>>, vector<2x256xf32>
    %127 = arith.mulf %126, %125 : vector<2x256xf32>
    %128 = arith.addf %112, %127 : vector<2x256xf32>
    %c16_i32 = arith.constant 16 : i32
    %129 = tpu.dynamic_rotate %56 by %c16_i32 dim 1 : vector<2x256xf32>, i32 -> vector<2x256xf32>
    %c34 = arith.constant 34 : index
    %c0_44 = arith.constant 0 : index
    %130 = vector.load %arg4[%c34, %c0_44] : memref<98x256xf32, #tpu.memory_space<vmem>>, vector<2x256xf32>
    %131 = arith.mulf %130, %129 : vector<2x256xf32>
    %132 = arith.addf %116, %131 : vector<2x256xf32>
    %c15_i32 = arith.constant 15 : i32
    %133 = tpu.dynamic_rotate %56 by %c15_i32 dim 1 : vector<2x256xf32>, i32 -> vector<2x256xf32>
    %c36 = arith.constant 36 : index
    %c0_45 = arith.constant 0 : index
    %134 = vector.load %arg4[%c36, %c0_45] : memref<98x256xf32, #tpu.memory_space<vmem>>, vector<2x256xf32>
    %135 = arith.mulf %134, %133 : vector<2x256xf32>
    %136 = arith.addf %120, %135 : vector<2x256xf32>
    %c14_i32 = arith.constant 14 : i32
    %137 = tpu.dynamic_rotate %56 by %c14_i32 dim 1 : vector<2x256xf32>, i32 -> vector<2x256xf32>
    %c38 = arith.constant 38 : index
    %c0_46 = arith.constant 0 : index
    %138 = vector.load %arg4[%c38, %c0_46] : memref<98x256xf32, #tpu.memory_space<vmem>>, vector<2x256xf32>
    %139 = arith.mulf %138, %137 : vector<2x256xf32>
    %140 = arith.addf %124, %139 : vector<2x256xf32>
    %c13_i32 = arith.constant 13 : i32
    %141 = tpu.dynamic_rotate %56 by %c13_i32 dim 1 : vector<2x256xf32>, i32 -> vector<2x256xf32>
    %c40 = arith.constant 40 : index
    %c0_47 = arith.constant 0 : index
    %142 = vector.load %arg4[%c40, %c0_47] : memref<98x256xf32, #tpu.memory_space<vmem>>, vector<2x256xf32>
    %143 = arith.mulf %142, %141 : vector<2x256xf32>
    %144 = arith.addf %128, %143 : vector<2x256xf32>
    %c3_i32 = arith.constant 3 : i32
    %145 = tpu.dynamic_rotate %56 by %c3_i32 dim 1 : vector<2x256xf32>, i32 -> vector<2x256xf32>
    %c42 = arith.constant 42 : index
    %c0_48 = arith.constant 0 : index
    %146 = vector.load %arg4[%c42, %c0_48] : memref<98x256xf32, #tpu.memory_space<vmem>>, vector<2x256xf32>
    %147 = arith.mulf %146, %145 : vector<2x256xf32>
    %148 = arith.addf %132, %147 : vector<2x256xf32>
    %c2_i32 = arith.constant 2 : i32
    %149 = tpu.dynamic_rotate %56 by %c2_i32 dim 1 : vector<2x256xf32>, i32 -> vector<2x256xf32>
    %c44 = arith.constant 44 : index
    %c0_49 = arith.constant 0 : index
    %150 = vector.load %arg4[%c44, %c0_49] : memref<98x256xf32, #tpu.memory_space<vmem>>, vector<2x256xf32>
    %151 = arith.mulf %150, %149 : vector<2x256xf32>
    %152 = arith.addf %136, %151 : vector<2x256xf32>
    %c1_i32 = arith.constant 1 : i32
    %153 = tpu.dynamic_rotate %56 by %c1_i32 dim 1 : vector<2x256xf32>, i32 -> vector<2x256xf32>
    %c46 = arith.constant 46 : index
    %c0_50 = arith.constant 0 : index
    %154 = vector.load %arg4[%c46, %c0_50] : memref<98x256xf32, #tpu.memory_space<vmem>>, vector<2x256xf32>
    %155 = arith.mulf %154, %153 : vector<2x256xf32>
    %156 = arith.addf %140, %155 : vector<2x256xf32>
    %c48 = arith.constant 48 : index
    %c0_51 = arith.constant 0 : index
    %157 = vector.load %arg4[%c48, %c0_51] : memref<98x256xf32, #tpu.memory_space<vmem>>, vector<2x256xf32>
    %158 = arith.mulf %157, %56 : vector<2x256xf32>
    %159 = arith.addf %144, %158 : vector<2x256xf32>
    %c255_i32 = arith.constant 255 : i32
    %160 = tpu.dynamic_rotate %56 by %c255_i32 dim 1 : vector<2x256xf32>, i32 -> vector<2x256xf32>
    %c50 = arith.constant 50 : index
    %c0_52 = arith.constant 0 : index
    %161 = vector.load %arg4[%c50, %c0_52] : memref<98x256xf32, #tpu.memory_space<vmem>>, vector<2x256xf32>
    %162 = arith.mulf %161, %160 : vector<2x256xf32>
    %163 = arith.addf %148, %162 : vector<2x256xf32>
    %c254_i32 = arith.constant 254 : i32
    %164 = tpu.dynamic_rotate %56 by %c254_i32 dim 1 : vector<2x256xf32>, i32 -> vector<2x256xf32>
    %c52 = arith.constant 52 : index
    %c0_53 = arith.constant 0 : index
    %165 = vector.load %arg4[%c52, %c0_53] : memref<98x256xf32, #tpu.memory_space<vmem>>, vector<2x256xf32>
    %166 = arith.mulf %165, %164 : vector<2x256xf32>
    %167 = arith.addf %152, %166 : vector<2x256xf32>
    %c253_i32 = arith.constant 253 : i32
    %168 = tpu.dynamic_rotate %56 by %c253_i32 dim 1 : vector<2x256xf32>, i32 -> vector<2x256xf32>
    %c54 = arith.constant 54 : index
    %c0_54 = arith.constant 0 : index
    %169 = vector.load %arg4[%c54, %c0_54] : memref<98x256xf32, #tpu.memory_space<vmem>>, vector<2x256xf32>
    %170 = arith.mulf %169, %168 : vector<2x256xf32>
    %171 = arith.addf %156, %170 : vector<2x256xf32>
    %c243_i32 = arith.constant 243 : i32
    %172 = tpu.dynamic_rotate %56 by %c243_i32 dim 1 : vector<2x256xf32>, i32 -> vector<2x256xf32>
    %c56 = arith.constant 56 : index
    %c0_55 = arith.constant 0 : index
    %173 = vector.load %arg4[%c56, %c0_55] : memref<98x256xf32, #tpu.memory_space<vmem>>, vector<2x256xf32>
    %174 = arith.mulf %173, %172 : vector<2x256xf32>
    %175 = arith.addf %159, %174 : vector<2x256xf32>
    %c242_i32 = arith.constant 242 : i32
    %176 = tpu.dynamic_rotate %56 by %c242_i32 dim 1 : vector<2x256xf32>, i32 -> vector<2x256xf32>
    %c58 = arith.constant 58 : index
    %c0_56 = arith.constant 0 : index
    %177 = vector.load %arg4[%c58, %c0_56] : memref<98x256xf32, #tpu.memory_space<vmem>>, vector<2x256xf32>
    %178 = arith.mulf %177, %176 : vector<2x256xf32>
    %179 = arith.addf %163, %178 : vector<2x256xf32>
    %c241_i32 = arith.constant 241 : i32
    %180 = tpu.dynamic_rotate %56 by %c241_i32 dim 1 : vector<2x256xf32>, i32 -> vector<2x256xf32>
    %c60 = arith.constant 60 : index
    %c0_57 = arith.constant 0 : index
    %181 = vector.load %arg4[%c60, %c0_57] : memref<98x256xf32, #tpu.memory_space<vmem>>, vector<2x256xf32>
    %182 = arith.mulf %181, %180 : vector<2x256xf32>
    %183 = arith.addf %167, %182 : vector<2x256xf32>
    %c240_i32 = arith.constant 240 : i32
    %184 = tpu.dynamic_rotate %56 by %c240_i32 dim 1 : vector<2x256xf32>, i32 -> vector<2x256xf32>
    %c62 = arith.constant 62 : index
    %c0_58 = arith.constant 0 : index
    %185 = vector.load %arg4[%c62, %c0_58] : memref<98x256xf32, #tpu.memory_space<vmem>>, vector<2x256xf32>
    %186 = arith.mulf %185, %184 : vector<2x256xf32>
    %187 = arith.addf %171, %186 : vector<2x256xf32>
    %c239_i32 = arith.constant 239 : i32
    %188 = tpu.dynamic_rotate %56 by %c239_i32 dim 1 : vector<2x256xf32>, i32 -> vector<2x256xf32>
    %c64 = arith.constant 64 : index
    %c0_59 = arith.constant 0 : index
    %189 = vector.load %arg4[%c64, %c0_59] : memref<98x256xf32, #tpu.memory_space<vmem>>, vector<2x256xf32>
    %190 = arith.mulf %189, %188 : vector<2x256xf32>
    %191 = arith.addf %175, %190 : vector<2x256xf32>
    %c238_i32 = arith.constant 238 : i32
    %192 = tpu.dynamic_rotate %56 by %c238_i32 dim 1 : vector<2x256xf32>, i32 -> vector<2x256xf32>
    %c66 = arith.constant 66 : index
    %c0_60 = arith.constant 0 : index
    %193 = vector.load %arg4[%c66, %c0_60] : memref<98x256xf32, #tpu.memory_space<vmem>>, vector<2x256xf32>
    %194 = arith.mulf %193, %192 : vector<2x256xf32>
    %195 = arith.addf %179, %194 : vector<2x256xf32>
    %c237_i32 = arith.constant 237 : i32
    %196 = tpu.dynamic_rotate %56 by %c237_i32 dim 1 : vector<2x256xf32>, i32 -> vector<2x256xf32>
    %c68 = arith.constant 68 : index
    %c0_61 = arith.constant 0 : index
    %197 = vector.load %arg4[%c68, %c0_61] : memref<98x256xf32, #tpu.memory_space<vmem>>, vector<2x256xf32>
    %198 = arith.mulf %197, %196 : vector<2x256xf32>
    %199 = arith.addf %183, %198 : vector<2x256xf32>
    %c227_i32 = arith.constant 227 : i32
    %200 = tpu.dynamic_rotate %56 by %c227_i32 dim 1 : vector<2x256xf32>, i32 -> vector<2x256xf32>
    %c70 = arith.constant 70 : index
    %c0_62 = arith.constant 0 : index
    %201 = vector.load %arg4[%c70, %c0_62] : memref<98x256xf32, #tpu.memory_space<vmem>>, vector<2x256xf32>
    %202 = arith.mulf %201, %200 : vector<2x256xf32>
    %203 = arith.addf %187, %202 : vector<2x256xf32>
    %c226_i32 = arith.constant 226 : i32
    %204 = tpu.dynamic_rotate %56 by %c226_i32 dim 1 : vector<2x256xf32>, i32 -> vector<2x256xf32>
    %c72 = arith.constant 72 : index
    %c0_63 = arith.constant 0 : index
    %205 = vector.load %arg4[%c72, %c0_63] : memref<98x256xf32, #tpu.memory_space<vmem>>, vector<2x256xf32>
    %206 = arith.mulf %205, %204 : vector<2x256xf32>
    %207 = arith.addf %191, %206 : vector<2x256xf32>
    %c225_i32 = arith.constant 225 : i32
    %208 = tpu.dynamic_rotate %56 by %c225_i32 dim 1 : vector<2x256xf32>, i32 -> vector<2x256xf32>
    %c74 = arith.constant 74 : index
    %c0_64 = arith.constant 0 : index
    %209 = vector.load %arg4[%c74, %c0_64] : memref<98x256xf32, #tpu.memory_space<vmem>>, vector<2x256xf32>
    %210 = arith.mulf %209, %208 : vector<2x256xf32>
    %211 = arith.addf %195, %210 : vector<2x256xf32>
    %c224_i32 = arith.constant 224 : i32
    %212 = tpu.dynamic_rotate %56 by %c224_i32 dim 1 : vector<2x256xf32>, i32 -> vector<2x256xf32>
    %c76 = arith.constant 76 : index
    %c0_65 = arith.constant 0 : index
    %213 = vector.load %arg4[%c76, %c0_65] : memref<98x256xf32, #tpu.memory_space<vmem>>, vector<2x256xf32>
    %214 = arith.mulf %213, %212 : vector<2x256xf32>
    %215 = arith.addf %199, %214 : vector<2x256xf32>
    %c223_i32 = arith.constant 223 : i32
    %216 = tpu.dynamic_rotate %56 by %c223_i32 dim 1 : vector<2x256xf32>, i32 -> vector<2x256xf32>
    %c78 = arith.constant 78 : index
    %c0_66 = arith.constant 0 : index
    %217 = vector.load %arg4[%c78, %c0_66] : memref<98x256xf32, #tpu.memory_space<vmem>>, vector<2x256xf32>
    %218 = arith.mulf %217, %216 : vector<2x256xf32>
    %219 = arith.addf %203, %218 : vector<2x256xf32>
    %c222_i32 = arith.constant 222 : i32
    %220 = tpu.dynamic_rotate %56 by %c222_i32 dim 1 : vector<2x256xf32>, i32 -> vector<2x256xf32>
    %c80 = arith.constant 80 : index
    %c0_67 = arith.constant 0 : index
    %221 = vector.load %arg4[%c80, %c0_67] : memref<98x256xf32, #tpu.memory_space<vmem>>, vector<2x256xf32>
    %222 = arith.mulf %221, %220 : vector<2x256xf32>
    %223 = arith.addf %207, %222 : vector<2x256xf32>
    %c221_i32 = arith.constant 221 : i32
    %224 = tpu.dynamic_rotate %56 by %c221_i32 dim 1 : vector<2x256xf32>, i32 -> vector<2x256xf32>
    %c82 = arith.constant 82 : index
    %c0_68 = arith.constant 0 : index
    %225 = vector.load %arg4[%c82, %c0_68] : memref<98x256xf32, #tpu.memory_space<vmem>>, vector<2x256xf32>
    %226 = arith.mulf %225, %224 : vector<2x256xf32>
    %227 = arith.addf %211, %226 : vector<2x256xf32>
    %c211_i32 = arith.constant 211 : i32
    %228 = tpu.dynamic_rotate %56 by %c211_i32 dim 1 : vector<2x256xf32>, i32 -> vector<2x256xf32>
    %c84 = arith.constant 84 : index
    %c0_69 = arith.constant 0 : index
    %229 = vector.load %arg4[%c84, %c0_69] : memref<98x256xf32, #tpu.memory_space<vmem>>, vector<2x256xf32>
    %230 = arith.mulf %229, %228 : vector<2x256xf32>
    %231 = arith.addf %215, %230 : vector<2x256xf32>
    %c210_i32 = arith.constant 210 : i32
    %232 = tpu.dynamic_rotate %56 by %c210_i32 dim 1 : vector<2x256xf32>, i32 -> vector<2x256xf32>
    %c86 = arith.constant 86 : index
    %c0_70 = arith.constant 0 : index
    %233 = vector.load %arg4[%c86, %c0_70] : memref<98x256xf32, #tpu.memory_space<vmem>>, vector<2x256xf32>
    %234 = arith.mulf %233, %232 : vector<2x256xf32>
    %235 = arith.addf %219, %234 : vector<2x256xf32>
    %c209_i32 = arith.constant 209 : i32
    %236 = tpu.dynamic_rotate %56 by %c209_i32 dim 1 : vector<2x256xf32>, i32 -> vector<2x256xf32>
    %c88 = arith.constant 88 : index
    %c0_71 = arith.constant 0 : index
    %237 = vector.load %arg4[%c88, %c0_71] : memref<98x256xf32, #tpu.memory_space<vmem>>, vector<2x256xf32>
    %238 = arith.mulf %237, %236 : vector<2x256xf32>
    %239 = arith.addf %223, %238 : vector<2x256xf32>
    %c208_i32 = arith.constant 208 : i32
    %240 = tpu.dynamic_rotate %56 by %c208_i32 dim 1 : vector<2x256xf32>, i32 -> vector<2x256xf32>
    %c90 = arith.constant 90 : index
    %c0_72 = arith.constant 0 : index
    %241 = vector.load %arg4[%c90, %c0_72] : memref<98x256xf32, #tpu.memory_space<vmem>>, vector<2x256xf32>
    %242 = arith.mulf %241, %240 : vector<2x256xf32>
    %243 = arith.addf %227, %242 : vector<2x256xf32>
    %c207_i32 = arith.constant 207 : i32
    %244 = tpu.dynamic_rotate %56 by %c207_i32 dim 1 : vector<2x256xf32>, i32 -> vector<2x256xf32>
    %c92 = arith.constant 92 : index
    %c0_73 = arith.constant 0 : index
    %245 = vector.load %arg4[%c92, %c0_73] : memref<98x256xf32, #tpu.memory_space<vmem>>, vector<2x256xf32>
    %246 = arith.mulf %245, %244 : vector<2x256xf32>
    %247 = arith.addf %231, %246 : vector<2x256xf32>
    %c206_i32 = arith.constant 206 : i32
    %248 = tpu.dynamic_rotate %56 by %c206_i32 dim 1 : vector<2x256xf32>, i32 -> vector<2x256xf32>
    %c94 = arith.constant 94 : index
    %c0_74 = arith.constant 0 : index
    %249 = vector.load %arg4[%c94, %c0_74] : memref<98x256xf32, #tpu.memory_space<vmem>>, vector<2x256xf32>
    %250 = arith.mulf %249, %248 : vector<2x256xf32>
    %251 = arith.addf %235, %250 : vector<2x256xf32>
    %c205_i32 = arith.constant 205 : i32
    %252 = tpu.dynamic_rotate %56 by %c205_i32 dim 1 : vector<2x256xf32>, i32 -> vector<2x256xf32>
    %c96 = arith.constant 96 : index
    %c0_75 = arith.constant 0 : index
    %253 = vector.load %arg4[%c96, %c0_75] : memref<98x256xf32, #tpu.memory_space<vmem>>, vector<2x256xf32>
    %254 = arith.mulf %253, %252 : vector<2x256xf32>
    %255 = arith.addf %239, %254 : vector<2x256xf32>
    %256 = arith.addf %255, %243 : vector<2x256xf32>
    %257 = arith.addf %247, %251 : vector<2x256xf32>
    %258 = arith.addf %256, %257 : vector<2x256xf32>
    %259 = vector.extract_strided_slice %258 {offsets = [0, 0], sizes = [1, 256], strides = [1, 1]} : vector<2x256xf32> to vector<1x256xf32>
    %260 = vector.extract_strided_slice %258 {offsets = [1, 0], sizes = [1, 256], strides = [1, 1]} : vector<2x256xf32> to vector<1x256xf32>
    %261 = arith.addf %259, %260 : vector<1x256xf32>
    %262 = arith.negf %261 : vector<1x256xf32>
    %263 = math.exp %262 : vector<1x256xf32>
    %cst_76 = arith.constant 1.000000e+00 : f32
    %264 = vector.broadcast %cst_76 : f32 to vector<1x256xf32>
    %265 = arith.addf %264, %263 : vector<1x256xf32>
    %266 = arith.divf %264, %265 : vector<1x256xf32>
    %267 = vector.broadcast %266 : vector<1x256xf32> to vector<32x256xf32>
    %268 = arith.mulf %49, %267 : vector<32x256xf32>
    %c0_77 = arith.constant 0 : index
    %c0_78 = arith.constant 0 : index
    %c0_79 = arith.constant 0 : index
    %269 = vector.load %arg5[%c0_77, %c0_78, %c0_79] : memref<1x32x256xf32, #tpu.memory_space<vmem>>, vector<1x32x256xf32>
    %270 = vector.shape_cast %269 : vector<1x32x256xf32> to vector<32x256xf32>
    %271 = vector.shape_cast %268 : vector<32x256xf32> to vector<1x32x256xf32>
    tpu.vector_store %arg5[%c0_77, %c0_78, %c0_79], %271 {strides = array<i32>} : memref<1x32x256xf32, #tpu.memory_space<vmem>>, vector<1x32x256xf32>,
    return
  }
  func.func @transform_0(%arg0: i32) -> (i32, i32, i32) {
    %c0_i32 = arith.constant 0 : i32
    %c0_i32_0 = arith.constant 0 : i32
    %c0_i32_1 = arith.constant 0 : i32
    return %arg0, %c0_i32, %c0_i32_0 : i32, i32, i32
  }
  func.func @transform_1(%arg0: i32) -> (i32, i32) {
    %c0_i32 = arith.constant 0 : i32
    %c0_i32_0 = arith.constant 0 : i32
    %c0_i32_1 = arith.constant 0 : i32
    return %c0_i32, %c0_i32_0 : i32, i32
  }
  func.func @transform_2(%arg0: i32) -> (i32, i32) {
    %c0_i32 = arith.constant 0 : i32
    %c0_i32_0 = arith.constant 0 : i32
    %c0_i32_1 = arith.constant 0 : i32
    return %c0_i32, %c0_i32_0 : i32, i32
  }
  func.func @transform_3(%arg0: i32) -> (i32, i32) {
    %c0_i32 = arith.constant 0 : i32
    %c0_i32_0 = arith.constant 0 : i32
    %c0_i32_1 = arith.constant 0 : i32
    return %c0_i32, %c0_i32_0 : i32, i32
  }
  func.func @transform_4(%arg0: i32) -> (i32, i32, i32) {
    %c0_i32 = arith.constant 0 : i32
    %c0_i32_0 = arith.constant 0 : i32
    %c0_i32_1 = arith.constant 0 : i32
    return %arg0, %c0_i32, %c0_i32_0 : i32, i32, i32
  }
}

</mosaic_0001>

<llo_original>
// kernel: cbam_forward.1
$region0: #{cbam_forward.1}
  #allocation0 [shape = 'u32[]', space=smem, size = 0x4, offset = 0x4, fixed_abs, tag = 'smem constant byte address 0x4 - core index']
  #allocation1 [shape = 'u32[144,128]{1,0:T(1,128)}', space=vmem, size = 0x12000, scoped, tag = 'internal scratch']
  %s0 = inlined_call_operand.vmem [shape: f32[2,32,256], index: 0, kind: input, shape index: {}]
  %s1 = inlined_call_operand.vmem [shape: f32[32,2], index: 1, kind: input, shape index: {}]
  %s2 = inlined_call_operand.vmem [shape: f32[32,2], index: 2, kind: input, shape index: {}]
  %s3 = inlined_call_operand.vmem [shape: f32[98,256], index: 3, kind: input, shape index: {}]
  %s4 = inlined_call_operand.vmem [shape: f32[2,32,256], index: 4, kind: output, shape index: {}]
  %s5 = sld [smem:[#allocation0]]
  $region49: #{cbam_forward.1} parent=0
    _
  %s7 = ssub.s32 1, %s5
  %s8 = scalar_select 0, %s7, %s5
  loop: start=0, step=1, limit=4
  $region2: #{cbam_forward.1} parent=0 // loop_pre_header
    _
  $region3: #{cbam_forward.1} parent=0 // loop_header
    %s10 = sphi 0, %s14
    %p11 = scmp.ge.s32.totalorder %s10, 4
    %s20 = sphi 0, %s22
    %s23 = sphi 0, %s20
    %s24 = sphi 0, %s23
    %s40 = sphi 0, %s24
    %s44 = sphi 0, %s44
    %s46 = sphi 0, %s44
    %s47 = sphi 0, %s46
    %s61 = sphi 0, %s47
    %s65 = sphi 0, %s65
    %s67 = sphi 0, %s65
    %s68 = sphi 0, %s67
    %s82 = sphi 0, %s68
    %s86 = sphi 0, %s86
    %s88 = sphi 0, %s86
    %s89 = sphi 0, %s88
    %s103 = sphi 0, %s89
    %s109 = sphi 0, %s111
    %s112 = sphi 0, %s109
    %s113 = sphi 0, %s112
    %s129 = sphi 0, %s113
  $region4: #{cbam_forward.1} parent=0 // loop_header_branch
    %13 = sbr.rel (%p11) target = $region8
  $region5: #{cbam_forward.1} parent=0 // loop_body
    %s15 = ssub.s32 %s10, 1
    %s16 = ssub.s32 %s10, 2
    %s17 = sadd.s32 %s10, 1
    %s18 = ssub.s32 %s10, %s17
    %p19 = scmp.eq.s32.totalorder %s18, 0
    %s21 = sadd.s32 %s20, 1
    %s22 = scalar_select %p19, %s20, %s21
    %p25 = pneg %p19
    %p26 = scmp.eq.s32.totalorder %s10, 1
    %p27 = por %p25, %p26
    %p28 = scmp.ne.s32.totalorder %s20, %s23
    %p29 = scmp.eq.s32.totalorder %s10, 0
    %p30 = por %p28, %p29
    %p31 = scmp.ne.s32.totalorder %s20, %s23
    %p32 = scmp.eq.s32.totalorder %s15, 1
    %p33 = por %p31, %p32
    %p34 = scmp.ne.s32.totalorder %s23, %s24
    %p35 = scmp.eq.s32.totalorder %s15, 0
    %p36 = por %p34, %p35
    %p37 = scmp.ne.s32.totalorder %s23, %s24
    %p38 = scmp.eq.s32.totalorder %s16, 1
    %p39 = por %p37, %p38
    %p41 = scmp.ne.s32.totalorder %s24, %s40
    %p42 = scmp.eq.s32.totalorder %s16, 0
    %p43 = por %p41, %p42
    %s45 = sadd.s32 %s44, 1
    %p48 = scmp.eq.s32.totalorder %s10, 1
    %p49 = scmp.ne.s32.totalorder %s44, %s46
    %p50 = scmp.eq.s32.totalorder %s10, 0
    %p51 = por %p49, %p50
    %p52 = scmp.ne.s32.totalorder %s44, %s46
    %p53 = scmp.eq.s32.totalorder %s15, 1
    %p54 = por %p52, %p53
    %p55 = scmp.ne.s32.totalorder %s46, %s47
    %p56 = scmp.eq.s32.totalorder %s15, 0
    %p57 = por %p55, %p56
    %p58 = scmp.ne.s32.totalorder %s46, %s47
    %p59 = scmp.eq.s32.totalorder %s16, 1
    %p60 = por %p58, %p59
    %p62 = scmp.ne.s32.totalorder %s47, %s61
    %p63 = scmp.eq.s32.totalorder %s16, 0
    %p64 = por %p62, %p63
    %s66 = sadd.s32 %s65, 1
    %p69 = scmp.eq.s32.totalorder %s10, 1
    %p70 = scmp.ne.s32.totalorder %s65, %s67
    %p71 = scmp.eq.s32.totalorder %s10, 0
    %p72 = por %p70, %p71
    %p73 = scmp.ne.s32.totalorder %s65, %s67
    %p74 = scmp.eq.s32.totalorder %s15, 1
    %p75 = por %p73, %p74
    %p76 = scmp.ne.s32.totalorder %s67, %s68
    %p77 = scmp.eq.s32.totalorder %s15, 0
    %p78 = por %p76, %p77
    %p79 = scmp.ne.s32.totalorder %s67, %s68
    %p80 = scmp.eq.s32.totalorder %s16, 1
    %p81 = por %p79, %p80
    %p83 = scmp.ne.s32.totalorder %s68, %s82
    %p84 = scmp.eq.s32.totalorder %s16, 0
    %p85 = por %p83, %p84
    %s87 = sadd.s32 %s86, 1
    %p90 = scmp.eq.s32.totalorder %s10, 1
    %p91 = scmp.ne.s32.totalorder %s86, %s88
    %p92 = scmp.eq.s32.totalorder %s10, 0
    %p93 = por %p91, %p92
    %p94 = scmp.ne.s32.totalorder %s86, %s88
    %p95 = scmp.eq.s32.totalorder %s15, 1
    %p96 = por %p94, %p95
    %p97 = scmp.ne.s32.totalorder %s88, %s89
    %p98 = scmp.eq.s32.totalorder %s15, 0
    %p99 = por %p97, %p98
    %p100 = scmp.ne.s32.totalorder %s88, %s89
    %p101 = scmp.eq.s32.totalorder %s16, 1
    %p102 = por %p100, %p101
    %p104 = scmp.ne.s32.totalorder %s89, %s103
    %p105 = scmp.eq.s32.totalorder %s16, 0
    %p106 = por %p104, %p105
    %s107 = ssub.s32 %s10, %s17
    %p108 = scmp.eq.s32.totalorder %s107, 0
    %s110 = sadd.s32 %s109, 1
    %s111 = scalar_select %p108, %s109, %s110
    %p114 = pneg %p108
    %p115 = scmp.eq.s32.totalorder %s10, 1
    %p116 = por %p114, %p115
    %p117 = scmp.ne.s32.totalorder %s109, %s112
    %p118 = scmp.eq.s32.totalorder %s10, 0
    %p119 = por %p117, %p118
    %p120 = scmp.ne.s32.totalorder %s109, %s112
    %p121 = scmp.eq.s32.totalorder %s15, 1
    %p122 = por %p120, %p121
    %p123 = scmp.ne.s32.totalorder %s112, %s113
    %p124 = scmp.eq.s32.totalorder %s15, 0
    %p125 = por %p123, %p124
    %p126 = scmp.ne.s32.totalorder %s112, %s113
    %p127 = scmp.eq.s32.totalorder %s16, 1
    %p128 = por %p126, %p127
    %p130 = scmp.ne.s32.totalorder %s113, %s129
    %p131 = scmp.eq.s32.totalorder %s16, 0
    %p132 = por %p130, %p131
    %p133 = scmp.le.s32.totalorder 1, %s10
    %p134 = scmp.lt.s32.totalorder %s10, 3
    %p135 = pnand %p133, %p134
    %p136 = pneg %p135
    // Predicated region
    $region9: #{cbam_forward.1} parent=5 // pred_check
      _
    $region10: #{cbam_forward.1} parent=5 // pred_check_branch
      %138 = sbr.rel (%p135) target = $region12
    $region11: #{cbam_forward.1} parent=5 // pred_region
      %s139 = ssub.s32 %s10, 1
      // Predicated region
      $region13: #{cbam_forward.1} parent=11 // pred_check
        %p140 = pneg %p57
      $region14: #{cbam_forward.1} parent=11 // pred_check_branch
        %142 = sbr.rel (%p140) target = $region16
      $region15: #{cbam_forward.1} parent=11 // pred_region
        _
      $region16: #{cbam_forward.1} parent=11 // pred_fallthru
        _
      // Predicated region
      $region17: #{cbam_forward.1} parent=11 // pred_check
        %p143 = pneg %p78
      $region18: #{cbam_forward.1} parent=11 // pred_check_branch
        %145 = sbr.rel (%p143) target = $region20
      $region19: #{cbam_forward.1} parent=11 // pred_region
        _
      $region20: #{cbam_forward.1} parent=11 // pred_fallthru
        _
      // Predicated region
      $region21: #{cbam_forward.1} parent=11 // pred_check
        %p146 = pneg %p99
      $region22: #{cbam_forward.1} parent=11 // pred_check_branch
        %148 = sbr.rel (%p146) target = $region24
      $region23: #{cbam_forward.1} parent=11 // pred_region
        _
      $region24: #{cbam_forward.1} parent=11 // pred_fallthru
        _
    $region12: #{cbam_forward.1} parent=5 // pred_fallthru
      _
    %p149 = scmp.lt.s32.totalorder %s10, 2
    // Predicated region
    $region25: #{cbam_forward.1} parent=5 // pred_check
      %p150 = pneg %p149
    $region26: #{cbam_forward.1} parent=5 // pred_check_branch
      %152 = sbr.rel (%p150) target = $region28
    $region27: #{cbam_forward.1} parent=5 // pred_region
      // Predicated region
      $region29: #{cbam_forward.1} parent=27 // pred_check
        %p153 = pneg %p30
      $region30: #{cbam_forward.1} parent=27 // pred_check_branch
        %155 = sbr.rel (%p153) target = $region32
      $region31: #{cbam_forward.1} parent=27 // pred_region
        %p156 = scmp.lt.s32.totalorder %s10, 1
        %s157 = scalar_select %p156, %s10, 1
        %s158 = smul.addr %s157, 8
        %s159 = smul.addr %s158, 8
        %s160 = scalar_lea.vmem %s0, %s159
      $region32: #{cbam_forward.1} parent=27 // pred_fallthru
        _
    $region28: #{cbam_forward.1} parent=5 // pred_fallthru
      _
    %p161 = scmp.le.s32.totalorder 1, %s10
    %p162 = scmp.lt.s32.totalorder %s10, 3
    %p163 = pnand %p161, %p162
    %p164 = pneg %p163
    // Predicated region
    $region33: #{cbam_forward.1} parent=5 // pred_check
      _
    $region34: #{cbam_forward.1} parent=5 // pred_check_branch
      %166 = sbr.rel (%p163) target = $region36
    $region35: #{cbam_forward.1} parent=5 // pred_region
      %s167 = ssub.s32 %s10, 1
      %p168 = scmp.lt.s32.totalorder %s15, 1
      %s169 = scalar_select %p168, %s15, 1
      %s170 = smul.addr %s169, 8
      %s171 = smul.addr %s170, 8
      %s172 = scalar_lea.vmem %s0, %s171
      %p173 = pneg %p36
      %p174 = pneg %p33
      %p175 = pneg %p57
      %p176 = pneg %p54
      %p177 = pneg %p78
      %p178 = pneg %p75
      %p179 = pneg %p99
      %p180 = pneg %p96
      %p181 = pneg %p125
      %p182 = pneg %p122
      %p183 = scmp.lt.s32.totalorder %s15, 1
      %s184 = scalar_select %p183, %s15, 1
      %s185 = smul.addr %s184, 8
      %s186 = smul.addr %s185, 8
      %s187 = scalar_lea.vmem %s4, %s186
      %p188 = scmp.lt.s32.totalorder %s15, 1
      %s189 = scalar_select %p188, %s15, 1
      %s190 = smul.addr %s189, 8
      %s191 = smul.addr %s190, 8
      %s192 = scalar_lea.vmem %s0, %s191
      %p193 = scmp.lt.s32.totalorder %s15, 1
      %s194 = scalar_select %p193, %s15, 1
      %s195 = smul.addr %s194, 8
      %s196 = smul.addr %s195, 8
      %s197 = scalar_lea.vmem %s4, %s196
      %v198 = vld [vmem:[%s192] sm:$0xff]
      %v199 = vld [vmem:[%s192 + $0x8] sm:$0xff]
      %v200 = vld [vmem:[%s192 + $0x10] sm:$0xff]
      %v201 = vld [vmem:[%s192 + $0x18] sm:$0xff]
      %v202 = vld [vmem:[%s192 + $0x20] sm:$0xff]
      %v203 = vld [vmem:[%s192 + $0x28] sm:$0xff]
      %v204 = vld [vmem:[%s192 + $0x30] sm:$0xff]
      %v205 = vld [vmem:[%s192 + $0x38] sm:$0xff]
      %v206 = vmax.f32 %v198, %v199
      %207 = vmax.xlane.f32.xlu0 %v206
      %v208 = vpop.xlane.xlu0 %207
      %v209 = vmax.f32 %v200, %v201
      %210 = vmax.xlane.f32.xlu0 %v209
      %v211 = vpop.xlane.xlu0 %210
      %v212 = vmax.f32 %v202, %v203
      %213 = vmax.xlane.f32.xlu0 %v212
      %v214 = vpop.xlane.xlu0 %213
      %v215 = vmax.f32 %v204, %v205
      %216 = vmax.xlane.f32.xlu0 %v215
      %v217 = vpop.xlane.xlu0 %216
      %v218 = vadd.f32 %v198, %v199
      %219 = vadd.xlane.f32.xlu0 %v218
      %v220 = vpop.xlane.xlu0 %219
      %v221 = vadd.f32 %v200, %v201
      %222 = vadd.xlane.f32.xlu0 %v221
      %v223 = vpop.xlane.xlu0 %222
      %v224 = vadd.f32 %v202, %v203
      %225 = vadd.xlane.f32.xlu0 %v224
      %v226 = vpop.xlane.xlu0 %225
      %v227 = vadd.f32 %v204, %v205
      %228 = vadd.xlane.f32.xlu0 %v227
      %v229 = vpop.xlane.xlu0 %228
      %v230 = vmul.f32 %v220, 0.00390625
      %v231 = vmul.f32 %v223, 0.00390625
      %v232 = vmul.f32 %v226, 0.00390625
      %v233 = vmul.f32 %v229, 0.00390625
      %vm234 = vcmask 7168
      %v235 = vsel %vm234, %v208, %v230
      %v236 = vsel %vm234, %v211, %v231
      %v237 = vsel %vm234, %v214, %v232
      %v238 = vsel %vm234, %v217, %v233
      %v239 = vld [vmem:[%s1] sm:$0xff]
      %v240 = vld [vmem:[%s1 + $0x8] sm:$0xff]
      %v241 = vld [vmem:[%s1 + $0x10] sm:$0xff]
      %v242 = vld [vmem:[%s1 + $0x18] sm:$0xff]
      %244 = vset.pattern.permute.xlu0 0
      %245 = vperm.xlu0 %244, %v239
      %v246 = vpop.permute.xlu0 %245
      %249 = vset.pattern.permute.xlu0 0
      %250 = vperm.xlu0 %249, %v240
      %v251 = vpop.permute.xlu0 %250
      %254 = vset.pattern.permute.xlu0 0
      %255 = vperm.xlu0 %254, %v241
      %v256 = vpop.permute.xlu0 %255
      %259 = vset.pattern.permute.xlu0 0
      %260 = vperm.xlu0 %259, %v242
      %v261 = vpop.permute.xlu0 %260
      %v263 = vmul.f32 %v235, %v246
      %v264 = vmul.f32 %v236, %v251
      %v265 = vmul.f32 %v237, %v256
      %v266 = vmul.f32 %v238, %v261
      %vm267 = vcmask 15360
      %v268 = vsel %vm267, %v263, 0.0
      %v269 = vsel %vm267, %v264, 0.0
      %v270 = vadd.f32 %v268, %v269
      %v271 = vsel %vm267, %v265, 0.0
      %v272 = vadd.f32 %v270, %v271
      %v273 = vsel %vm267, %v266, 0.0
      %v274 = vadd.f32 %v272, %v273
      %v275 = vrot.slane %v274, 4
      %v276 = vadd.f32 %v274, %v275
      %v277 = vrot.slane %v276, 2
      %v278 = vadd.f32 %v276, %v277
      %v279 = vrot.slane %v278, 1
      %v280 = vadd.f32 %v278, %v279
      %vm281 = vcmp.gt.f32.partialorder %v280, 0.0
      %v282 = vmul.f32 %v280, 0.1
      %v283 = vsel %vm281, %v280, %v282
      %v284 = vld [vmem:[%s2] sm:$0xff]
      %v285 = vld [vmem:[%s2 + $0x8] sm:$0xff]
      %v286 = vld [vmem:[%s2 + $0x10] sm:$0xff]
      %v287 = vld [vmem:[%s2 + $0x18] sm:$0xff]
      %289 = vset.pattern.permute.xlu0 0
      %290 = vperm.xlu0 %289, %v284
      %v291 = vpop.permute.xlu0 %290
      %294 = vset.pattern.permute.xlu0 0
      %295 = vperm.xlu0 %294, %v285
      %v296 = vpop.permute.xlu0 %295
      %299 = vset.pattern.permute.xlu0 0
      %300 = vperm.xlu0 %299, %v286
      %v301 = vpop.permute.xlu0 %300
      %304 = vset.pattern.permute.xlu0 0
      %305 = vperm.xlu0 %304, %v287
      %v306 = vpop.permute.xlu0 %305
      %v308 = vmul.f32 %v283, %v291
      %v309 = vmul.f32 %v283, %v296
      %v310 = vmul.f32 %v283, %v301
      %v311 = vmul.f32 %v283, %v306
      %v312 = vadd.f32 %v308, 0.0
      %v313 = vadd.f32 %v309, 0.0
      %v314 = vadd.f32 %v310, 0.0
      %v315 = vadd.f32 %v311, 0.0
      %316 = vset.pattern.permute.xlu0 1
      %317 = vperm.xlu0 %316, %v239
      %v318 = vpop.permute.xlu0 %317
      %320 = vset.pattern.permute.xlu0 1
      %321 = vperm.xlu0 %320, %v240
      %v322 = vpop.permute.xlu0 %321
      %324 = vset.pattern.permute.xlu0 1
      %325 = vperm.xlu0 %324, %v241
      %v326 = vpop.permute.xlu0 %325
      %328 = vset.pattern.permute.xlu0 1
      %329 = vperm.xlu0 %328, %v242
      %v330 = vpop.permute.xlu0 %329
      %v332 = vmul.f32 %v235, %v318
      %v333 = vmul.f32 %v236, %v322
      %v334 = vmul.f32 %v237, %v326
      %v335 = vmul.f32 %v238, %v330
      %v336 = vsel %vm267, %v332, 0.0
      %v337 = vsel %vm267, %v333, 0.0
      %v338 = vadd.f32 %v336, %v337
      %v339 = vsel %vm267, %v334, 0.0
      %v340 = vadd.f32 %v338, %v339
      %v341 = vsel %vm267, %v335, 0.0
      %v342 = vadd.f32 %v340, %v341
      %v343 = vrot.slane %v342, 4
      %v344 = vadd.f32 %v342, %v343
      %v345 = vrot.slane %v344, 2
      %v346 = vadd.f32 %v344, %v345
      %v347 = vrot.slane %v346, 1
      %v348 = vadd.f32 %v346, %v347
      %vm349 = vcmp.gt.f32.partialorder %v348, 0.0
      %v350 = vmul.f32 %v348, 0.1
      %v351 = vsel %vm349, %v348, %v350
      %352 = vset.pattern.permute.xlu0 1
      %353 = vperm.xlu0 %352, %v284
      %v354 = vpop.permute.xlu0 %353
      %356 = vset.pattern.permute.xlu0 1
      %357 = vperm.xlu0 %356, %v285
      %v358 = vpop.permute.xlu0 %357
      %360 = vset.pattern.permute.xlu0 1
      %361 = vperm.xlu0 %360, %v286
      %v362 = vpop.permute.xlu0 %361
      %364 = vset.pattern.permute.xlu0 1
      %365 = vperm.xlu0 %364, %v287
      %v366 = vpop.permute.xlu0 %365
      %v368 = vmul.f32 %v351, %v354
      %v369 = vmul.f32 %v351, %v358
      %v370 = vmul.f32 %v351, %v362
      %v371 = vmul.f32 %v351, %v366
      %v372 = vadd.f32 %v312, %v368
      %v373 = vadd.f32 %v313, %v369
      %v374 = vadd.f32 %v314, %v370
      %v375 = vadd.f32 %v315, %v371
      %380 = vrot.lane.b32.xlu0 %v372, 127
      %v381 = vpop.permute.xlu0 %380
      %382 = vrot.lane.b32.xlu0 %v373, 127
      %v383 = vpop.permute.xlu0 %382
      %384 = vrot.lane.b32.xlu0 %v374, 127
      %v385 = vpop.permute.xlu0 %384
      %386 = vrot.lane.b32.xlu0 %v375, 127
      %v387 = vpop.permute.xlu0 %386
      %v392 = vadd.f32 %v372, %v381
      %v393 = vadd.f32 %v373, %v383
      %v394 = vadd.f32 %v374, %v385
      %v395 = vadd.f32 %v375, %v387
      %v396 = vxor.u32 %v392, 2147483648
      %v397 = vxor.u32 %v393, 2147483648
      %v398 = vxor.u32 %v394, 2147483648
      %v399 = vxor.u32 %v395, 2147483648
      %v400 = vmul.f32 %v396, 1.442695
      %v401 = vpow.pop %v400
      %v402 = vmul.f32 %v397, 1.442695
      %v403 = vpow.pop %v402
      %v404 = vmul.f32 %v398, 1.442695
      %v405 = vpow.pop %v404
      %v406 = vmul.f32 %v399, 1.442695
      %v407 = vpow.pop %v406
      %v408 = vadd.f32 %v401, 1.0
      %v409 = vadd.f32 %v403, 1.0
      %v410 = vadd.f32 %v405, 1.0
      %v411 = vadd.f32 %v407, 1.0
      %v412 = vrcp.pop %v408
      %v413 = vmul.f32 1.0, %v412
      %v414 = vrcp.pop %v409
      %v415 = vmul.f32 1.0, %v414
      %v416 = vrcp.pop %v410
      %v417 = vmul.f32 1.0, %v416
      %v418 = vrcp.pop %v411
      %v419 = vmul.f32 1.0, %v418
      %421 = vset.pattern.permute.xlu0 0
      %422 = vperm.xlu0 %421, %v413
      %v423 = vpop.permute.xlu0 %422
      %426 = vset.pattern.permute.xlu0 0
      %427 = vperm.xlu0 %426, %v415
      %v428 = vpop.permute.xlu0 %427
      %431 = vset.pattern.permute.xlu0 0
      %432 = vperm.xlu0 %431, %v417
      %v433 = vpop.permute.xlu0 %432
      %436 = vset.pattern.permute.xlu0 0
      %437 = vperm.xlu0 %436, %v419
      %v438 = vpop.permute.xlu0 %437
      %v440 = vmul.f32 %v198, %v423
      %v441 = vmul.f32 %v199, %v423
      %v442 = vmul.f32 %v200, %v428
      %v443 = vmul.f32 %v201, %v428
      %v444 = vmul.f32 %v202, %v433
      %v445 = vmul.f32 %v203, %v433
      %v446 = vmul.f32 %v204, %v438
      %v447 = vmul.f32 %v205, %v438
      %v448 = vmax.f32 %v440, %v444
      %v449 = vmax.f32 %v442, %v446
      %v450 = vmax.f32 %v448, %v449
      %v451 = vrot.slane %v450, 4
      %v452 = vmax.f32 %v450, %v451
      %v453 = vrot.slane %v452, 2
      %v454 = vmax.f32 %v452, %v453
      %v455 = vrot.slane %v454, 1
      %v456 = vmax.f32 %v454, %v455
      %v457 = vmax.f32 %v441, %v445
      %v458 = vmax.f32 %v443, %v447
      %v459 = vmax.f32 %v457, %v458
      %v460 = vrot.slane %v459, 4
      %v461 = vmax.f32 %v459, %v460
      %v462 = vrot.slane %v461, 2
      %v463 = vmax.f32 %v461, %v462
      %v464 = vrot.slane %v463, 1
      %v465 = vmax.f32 %v463, %v464
      %v466 = vadd.f32 %v440, %v442
      %v467 = vadd.f32 %v466, %v444
      %v468 = vadd.f32 %v467, %v446
      %v469 = vrot.slane %v468, 4
      %v470 = vadd.f32 %v468, %v469
      %v471 = vrot.slane %v470, 2
      %v472 = vadd.f32 %v470, %v471
      %v473 = vrot.slane %v472, 1
      %v474 = vadd.f32 %v472, %v473
      %v475 = vadd.f32 %v441, %v443
      %v476 = vadd.f32 %v475, %v445
      %v477 = vadd.f32 %v476, %v447
      %v478 = vrot.slane %v477, 4
      %v479 = vadd.f32 %v477, %v478
      %v480 = vrot.slane %v479, 2
      %v481 = vadd.f32 %v479, %v480
      %v482 = vrot.slane %v481, 1
      %v483 = vadd.f32 %v481, %v482
      %v484 = vmul.f32 %v474, 0.03125
      %v485 = vmul.f32 %v483, 0.03125
      %vm486 = vcmask 1040384
      %v487 = vsel %vm486, %v456, %v484
      %v488 = vsel %vm486, %v465, %v485
      %489 = vrot.lane.b32.xlu0 %v487, 51
      %v490 = vpop.permute.xlu0 %489
      %491 = vrot.lane.b32.xlu0 %v488, 51
      %v492 = vpop.permute.xlu0 %491
      %v493 = vlaneseq
      %v494 = vand.u32 %v493, 127
      %vm495 = vcmp.lt.s32.totalorder %v494, 51
      %v496 = vsel %vm495, %v490, %v492
      %v497 = vsel %vm495, %v492, %v490
      %v498 = vld [vmem:[%s3] sm:$0x3]
      %v499 = vld [vmem:[%s3 + $0x8] sm:$0x3]
      %v500 = vmul.f32 %v498, %v497
      %v501 = vmul.f32 %v499, %v496
      %v502 = vadd.f32 %v500, 0.0
      %v503 = vadd.f32 %v501, 0.0
      %504 = vrot.lane.b32.xlu0 %v487, 50
      %v505 = vpop.permute.xlu0 %504
      %506 = vrot.lane.b32.xlu0 %v488, 50
      %v507 = vpop.permute.xlu0 %506
      %vm508 = vcmp.lt.s32.totalorder %v494, 50
      %v509 = vsel %vm508, %v505, %v507
      %v510 = vsel %vm508, %v507, %v505
      %v511 = vld [vmem:[%s3] sm:$0xc]
      %v512 = vld [vmem:[%s3 + $0x8] sm:$0xc]
      %v515 = vrot.slane %v510, 6
      %v516 = vrot.slane %v509, 6
      %v519 = vmul.f32 %v511, %v515
      %v520 = vmul.f32 %v512, %v516
      %v521 = vadd.f32 %v519, 0.0
      %v522 = vadd.f32 %v520, 0.0
      %523 = vrot.lane.b32.xlu0 %v487, 49
      %v524 = vpop.permute.xlu0 %523
      %525 = vrot.lane.b32.xlu0 %v488, 49
      %v526 = vpop.permute.xlu0 %525
      %vm527 = vcmp.lt.s32.totalorder %v494, 49
      %v528 = vsel %vm527, %v524, %v526
      %v529 = vsel %vm527, %v526, %v524
      %v530 = vld [vmem:[%s3] sm:$0x30]
      %v531 = vld [vmem:[%s3 + $0x8] sm:$0x30]
      %v534 = vrot.slane %v529, 4
      %v535 = vrot.slane %v528, 4
      %v538 = vmul.f32 %v530, %v534
      %v539 = vmul.f32 %v531, %v535
      %v540 = vadd.f32 %v538, 0.0
      %v541 = vadd.f32 %v539, 0.0
      %542 = vrot.lane.b32.xlu0 %v487, 48
      %v543 = vpop.permute.xlu0 %542
      %544 = vrot.lane.b32.xlu0 %v488, 48
      %v545 = vpop.permute.xlu0 %544
      %vm546 = vcmp.lt.s32.totalorder %v494, 48
      %v547 = vsel %vm546, %v543, %v545
      %v548 = vsel %vm546, %v545, %v543
      %v549 = vld [vmem:[%s3] sm:$0xc0]
      %v550 = vld [vmem:[%s3 + $0x8] sm:$0xc0]
      %v553 = vrot.slane %v548, 2
      %v554 = vrot.slane %v547, 2
      %v557 = vmul.f32 %v549, %v553
      %v558 = vmul.f32 %v550, %v554
      %v559 = vadd.f32 %v557, 0.0
      %v560 = vadd.f32 %v558, 0.0
      %561 = vrot.lane.b32.xlu0 %v487, 47
      %v562 = vpop.permute.xlu0 %561
      %563 = vrot.lane.b32.xlu0 %v488, 47
      %v564 = vpop.permute.xlu0 %563
      %vm565 = vcmp.lt.s32.totalorder %v494, 47
      %v566 = vsel %vm565, %v562, %v564
      %v567 = vsel %vm565, %v564, %v562
      %v568 = vld [vmem:[%s3 + $0x10] sm:$0x3]
      %v569 = vld [vmem:[%s3 + $0x18] sm:$0x3]
      %v570 = vmul.f32 %v568, %v567
      %v571 = vmul.f32 %v569, %v566
      %v572 = vadd.f32 %v502, %v570
      %v573 = vadd.f32 %v503, %v571
      %574 = vrot.lane.b32.xlu0 %v487, 46
      %v575 = vpop.permute.xlu0 %574
      %576 = vrot.lane.b32.xlu0 %v488, 46
      %v577 = vpop.permute.xlu0 %576
      %vm578 = vcmp.lt.s32.totalorder %v494, 46
      %v579 = vsel %vm578, %v575, %v577
      %v580 = vsel %vm578, %v577, %v575
      %v581 = vld [vmem:[%s3 + $0x10] sm:$0xc]
      %v582 = vld [vmem:[%s3 + $0x18] sm:$0xc]
      %v585 = vrot.slane %v580, 6
      %v586 = vrot.slane %v579, 6
      %v589 = vmul.f32 %v581, %v585
      %v590 = vmul.f32 %v582, %v586
      %v591 = vadd.f32 %v521, %v589
      %v592 = vadd.f32 %v522, %v590
      %593 = vrot.lane.b32.xlu0 %v487, 45
      %v594 = vpop.permute.xlu0 %593
      %595 = vrot.lane.b32.xlu0 %v488, 45
      %v596 = vpop.permute.xlu0 %595
      %vm597 = vcmp.lt.s32.totalorder %v494, 45
      %v598 = vsel %vm597, %v594, %v596
      %v599 = vsel %vm597, %v596, %v594
      %v600 = vld [vmem:[%s3 + $0x10] sm:$0x30]
      %v601 = vld [vmem:[%s3 + $0x18] sm:$0x30]
      %v604 = vrot.slane %v599, 4
      %v605 = vrot.slane %v598, 4
      %v608 = vmul.f32 %v600, %v604
      %v609 = vmul.f32 %v601, %v605
      %v610 = vadd.f32 %v540, %v608
      %v611 = vadd.f32 %v541, %v609
      %612 = vrot.lane.b32.xlu0 %v487, 35
      %v613 = vpop.permute.xlu0 %612
      %614 = vrot.lane.b32.xlu0 %v488, 35
      %v615 = vpop.permute.xlu0 %614
      %vm616 = vcmp.lt.s32.totalorder %v494, 35
      %v617 = vsel %vm616, %v613, %v615
      %v618 = vsel %vm616, %v615, %v613
      %v619 = vld [vmem:[%s3 + $0x10] sm:$0xc0]
      %v620 = vld [vmem:[%s3 + $0x18] sm:$0xc0]
      %v623 = vrot.slane %v618, 2
      %v624 = vrot.slane %v617, 2
      %v627 = vmul.f32 %v619, %v623
      %v628 = vmul.f32 %v620, %v624
      %v629 = vadd.f32 %v559, %v627
      %v630 = vadd.f32 %v560, %v628
      %631 = vrot.lane.b32.xlu0 %v487, 34
      %v632 = vpop.permute.xlu0 %631
      %633 = vrot.lane.b32.xlu0 %v488, 34
      %v634 = vpop.permute.xlu0 %633
      %vm635 = vcmp.lt.s32.totalorder %v494, 34
      %v636 = vsel %vm635, %v632, %v634
      %v637 = vsel %vm635, %v634, %v632
      %v638 = vld [vmem:[%s3 + $0x20] sm:$0x3]
      %v639 = vld [vmem:[%s3 + $0x28] sm:$0x3]
      %v640 = vmul.f32 %v638, %v637
      %v641 = vmul.f32 %v639, %v636
      %v642 = vadd.f32 %v572, %v640
      %v643 = vadd.f32 %v573, %v641
      %644 = vrot.lane.b32.xlu0 %v487, 33
      %v645 = vpop.permute.xlu0 %644
      %646 = vrot.lane.b32.xlu0 %v488, 33
      %v647 = vpop.permute.xlu0 %646
      %vm648 = vcmp.lt.s32.totalorder %v494, 33
      %v649 = vsel %vm648, %v645, %v647
      %v650 = vsel %vm648, %v647, %v645
      %v651 = vld [vmem:[%s3 + $0x20] sm:$0xc]
      %v652 = vld [vmem:[%s3 + $0x28] sm:$0xc]
      %v655 = vrot.slane %v650, 6
      %v656 = vrot.slane %v649, 6
      %v659 = vmul.f32 %v651, %v655
      %v660 = vmul.f32 %v652, %v656
      %v661 = vadd.f32 %v591, %v659
      %v662 = vadd.f32 %v592, %v660
      %663 = vrot.lane.b32.xlu0 %v487, 32
      %v664 = vpop.permute.xlu0 %663
      %665 = vrot.lane.b32.xlu0 %v488, 32
      %v666 = vpop.permute.xlu0 %665
      %vm667 = vcmp.lt.s32.totalorder %v494, 32
      %v668 = vsel %vm667, %v664, %v666
      %v669 = vsel %vm667, %v666, %v664
      %v670 = vld [vmem:[%s3 + $0x20] sm:$0x30]
      %v671 = vld [vmem:[%s3 + $0x28] sm:$0x30]
      %v674 = vrot.slane %v669, 4
      %v675 = vrot.slane %v668, 4
      %v678 = vmul.f32 %v670, %v674
      %v679 = vmul.f32 %v671, %v675
      %v680 = vadd.f32 %v610, %v678
      %v681 = vadd.f32 %v611, %v679
      %682 = vrot.lane.b32.xlu0 %v487, 31
      %v683 = vpop.permute.xlu0 %682
      %684 = vrot.lane.b32.xlu0 %v488, 31
      %v685 = vpop.permute.xlu0 %684
      %vm686 = vcmp.lt.s32.totalorder %v494, 31
      %v687 = vsel %vm686, %v683, %v685
      %v688 = vsel %vm686, %v685, %v683
      %v689 = vld [vmem:[%s3 + $0x20] sm:$0xc0]
      %v690 = vld [vmem:[%s3 + $0x28] sm:$0xc0]
      %v693 = vrot.slane %v688, 2
      %v694 = vrot.slane %v687, 2
      %v697 = vmul.f32 %v689, %v693
      %v698 = vmul.f32 %v690, %v694
      %v699 = vadd.f32 %v629, %v697
      %v700 = vadd.f32 %v630, %v698
      %701 = vrot.lane.b32.xlu0 %v487, 30
      %v702 = vpop.permute.xlu0 %701
      %703 = vrot.lane.b32.xlu0 %v488, 30
      %v704 = vpop.permute.xlu0 %703
      %vm705 = vcmp.lt.s32.totalorder %v494, 30
      %v706 = vsel %vm705, %v702, %v704
      %v707 = vsel %vm705, %v704, %v702
      %v708 = vld [vmem:[%s3 + $0x30] sm:$0x3]
      %v709 = vld [vmem:[%s3 + $0x38] sm:$0x3]
      %v710 = vmul.f32 %v708, %v707
      %v711 = vmul.f32 %v709, %v706
      %v712 = vadd.f32 %v642, %v710
      %v713 = vadd.f32 %v643, %v711
      %714 = vrot.lane.b32.xlu0 %v487, 29
      %v715 = vpop.permute.xlu0 %714
      %716 = vrot.lane.b32.xlu0 %v488, 29
      %v717 = vpop.permute.xlu0 %716
      %vm718 = vcmp.lt.s32.totalorder %v494, 29
      %v719 = vsel %vm718, %v715, %v717
      %v720 = vsel %vm718, %v717, %v715
      %v721 = vld [vmem:[%s3 + $0x30] sm:$0xc]
      %v722 = vld [vmem:[%s3 + $0x38] sm:$0xc]
      %v725 = vrot.slane %v720, 6
      %v726 = vrot.slane %v719, 6
      %v729 = vmul.f32 %v721, %v725
      %v730 = vmul.f32 %v722, %v726
      %v731 = vadd.f32 %v661, %v729
      %v732 = vadd.f32 %v662, %v730
      %733 = vrot.lane.b32.xlu0 %v487, 19
      %v734 = vpop.permute.xlu0 %733
      %735 = vrot.lane.b32.xlu0 %v488, 19
      %v736 = vpop.permute.xlu0 %735
      %vm737 = vcmp.lt.s32.totalorder %v494, 19
      %v738 = vsel %vm737, %v734, %v736
      %v739 = vsel %vm737, %v736, %v734
      %v740 = vld [vmem:[%s3 + $0x30] sm:$0x30]
      %v741 = vld [vmem:[%s3 + $0x38] sm:$0x30]
      %v744 = vrot.slane %v739, 4
      %v745 = vrot.slane %v738, 4
      %v748 = vmul.f32 %v740, %v744
      %v749 = vmul.f32 %v741, %v745
      %v750 = vadd.f32 %v680, %v748
      %v751 = vadd.f32 %v681, %v749
      %752 = vrot.lane.b32.xlu0 %v487, 18
      %v753 = vpop.permute.xlu0 %752
      %754 = vrot.lane.b32.xlu0 %v488, 18
      %v755 = vpop.permute.xlu0 %754
      %vm756 = vcmp.lt.s32.totalorder %v494, 18
      %v757 = vsel %vm756, %v753, %v755
      %v758 = vsel %vm756, %v755, %v753
      %v759 = vld [vmem:[%s3 + $0x30] sm:$0xc0]
      %v760 = vld [vmem:[%s3 + $0x38] sm:$0xc0]
      %v763 = vrot.slane %v758, 2
      %v764 = vrot.slane %v757, 2
      %v767 = vmul.f32 %v759, %v763
      %v768 = vmul.f32 %v760, %v764
      %v769 = vadd.f32 %v699, %v767
      %v770 = vadd.f32 %v700, %v768
      %771 = vrot.lane.b32.xlu0 %v487, 17
      %v772 = vpop.permute.xlu0 %771
      %773 = vrot.lane.b32.xlu0 %v488, 17
      %v774 = vpop.permute.xlu0 %773
      %vm775 = vcmp.lt.s32.totalorder %v494, 17
      %v776 = vsel %vm775, %v772, %v774
      %v777 = vsel %vm775, %v774, %v772
      %v778 = vld [vmem:[%s3 + $0x40] sm:$0x3]
      %v779 = vld [vmem:[%s3 + $0x48] sm:$0x3]
      %v780 = vmul.f32 %v778, %v777
      %v781 = vmul.f32 %v779, %v776
      %v782 = vadd.f32 %v712, %v780
      %v783 = vadd.f32 %v713, %v781
      %784 = vrot.lane.b32.xlu0 %v487, 16
      %v785 = vpop.permute.xlu0 %784
      %786 = vrot.lane.b32.xlu0 %v488, 16
      %v787 = vpop.permute.xlu0 %786
      %vm788 = vcmp.lt.s32.totalorder %v494, 16
      %v789 = vsel %vm788, %v785, %v787
      %v790 = vsel %vm788, %v787, %v785
      %v791 = vld [vmem:[%s3 + $0x40] sm:$0xc]
      %v792 = vld [vmem:[%s3 + $0x48] sm:$0xc]
      %v795 = vrot.slane %v790, 6
      %v796 = vrot.slane %v789, 6
      %v799 = vmul.f32 %v791, %v795
      %v800 = vmul.f32 %v792, %v796
      %v801 = vadd.f32 %v731, %v799
      %v802 = vadd.f32 %v732, %v800
      %803 = vrot.lane.b32.xlu0 %v487, 15
      %v804 = vpop.permute.xlu0 %803
      %805 = vrot.lane.b32.xlu0 %v488, 15
      %v806 = vpop.permute.xlu0 %805
      %vm807 = vcmp.lt.s32.totalorder %v494, 15
      %v808 = vsel %vm807, %v804, %v806
      %v809 = vsel %vm807, %v806, %v804
      %v810 = vld [vmem:[%s3 + $0x40] sm:$0x30]
      %v811 = vld [vmem:[%s3 + $0x48] sm:$0x30]
      %v814 = vrot.slane %v809, 4
      %v815 = vrot.slane %v808, 4
      %v818 = vmul.f32 %v810, %v814
      %v819 = vmul.f32 %v811, %v815
      %v820 = vadd.f32 %v750, %v818
      %v821 = vadd.f32 %v751, %v819
      %822 = vrot.lane.b32.xlu0 %v487, 14
      %v823 = vpop.permute.xlu0 %822
      %824 = vrot.lane.b32.xlu0 %v488, 14
      %v825 = vpop.permute.xlu0 %824
      %vm826 = vcmp.lt.s32.totalorder %v494, 14
      %v827 = vsel %vm826, %v823, %v825
      %v828 = vsel %vm826, %v825, %v823
      %v829 = vld [vmem:[%s3 + $0x40] sm:$0xc0]
      %v830 = vld [vmem:[%s3 + $0x48] sm:$0xc0]
      %v833 = vrot.slane %v828, 2
      %v834 = vrot.slane %v827, 2
      %v837 = vmul.f32 %v829, %v833
      %v838 = vmul.f32 %v830, %v834
      %v839 = vadd.f32 %v769, %v837
      %v840 = vadd.f32 %v770, %v838
      %841 = vrot.lane.b32.xlu0 %v487, 13
      %v842 = vpop.permute.xlu0 %841
      %843 = vrot.lane.b32.xlu0 %v488, 13
      %v844 = vpop.permute.xlu0 %843
      %vm845 = vcmp.lt.s32.totalorder %v494, 13
      %v846 = vsel %vm845, %v842, %v844
      %v847 = vsel %vm845, %v844, %v842
      %v848 = vld [vmem:[%s3 + $0x50] sm:$0x3]
      %v849 = vld [vmem:[%s3 + $0x58] sm:$0x3]
      %v850 = vmul.f32 %v848, %v847
      %v851 = vmul.f32 %v849, %v846
      %v852 = vadd.f32 %v782, %v850
      %v853 = vadd.f32 %v783, %v851
      %854 = vrot.lane.b32.xlu0 %v487, 3
      %v855 = vpop.permute.xlu0 %854
      %856 = vrot.lane.b32.xlu0 %v488, 3
      %v857 = vpop.permute.xlu0 %856
      %vm858 = vcmp.lt.s32.totalorder %v494, 3
      %v859 = vsel %vm858, %v855, %v857
      %v860 = vsel %vm858, %v857, %v855
      %v861 = vld [vmem:[%s3 + $0x50] sm:$0xc]
      %v862 = vld [vmem:[%s3 + $0x58] sm:$0xc]
      %v865 = vrot.slane %v860, 6
      %v866 = vrot.slane %v859, 6
      %v869 = vmul.f32 %v861, %v865
      %v870 = vmul.f32 %v862, %v866
      %v871 = vadd.f32 %v801, %v869
      %v872 = vadd.f32 %v802, %v870
      %873 = vrot.lane.b32.xlu0 %v487, 2
      %v874 = vpop.permute.xlu0 %873
      %875 = vrot.lane.b32.xlu0 %v488, 2
      %v876 = vpop.permute.xlu0 %875
      %vm877 = vcmp.lt.s32.totalorder %v494, 2
      %v878 = vsel %vm877, %v874, %v876
      %v879 = vsel %vm877, %v876, %v874
      %v880 = vld [vmem:[%s3 + $0x50] sm:$0x30]
      %v881 = vld [vmem:[%s3 + $0x58] sm:$0x30]
      %v884 = vrot.slane %v879, 4
      %v885 = vrot.slane %v878, 4
      %v888 = vmul.f32 %v880, %v884
      %v889 = vmul.f32 %v881, %v885
      %v890 = vadd.f32 %v820, %v888
      %v891 = vadd.f32 %v821, %v889
      %892 = vrot.lane.b32.xlu0 %v487, 1
      %v893 = vpop.permute.xlu0 %892
      %894 = vrot.lane.b32.xlu0 %v488, 1
      %v895 = vpop.permute.xlu0 %894
      %vm896 = vcmp.lt.s32.totalorder %v494, 1
      %v897 = vsel %vm896, %v893, %v895
      %v898 = vsel %vm896, %v895, %v893
      %v899 = vld [vmem:[%s3 + $0x50] sm:$0xc0]
      %v900 = vld [vmem:[%s3 + $0x58] sm:$0xc0]
      %v903 = vrot.slane %v898, 2
      %v904 = vrot.slane %v897, 2
      %v907 = vmul.f32 %v899, %v903
      %v908 = vmul.f32 %v900, %v904
      %v909 = vadd.f32 %v839, %v907
      %v910 = vadd.f32 %v840, %v908
      %v911 = vld [vmem:[%s3 + $0x60] sm:$0x3]
      %v912 = vld [vmem:[%s3 + $0x68] sm:$0x3]
      %v913 = vmul.f32 %v911, %v487
      %v914 = vmul.f32 %v912, %v488
      %v915 = vadd.f32 %v852, %v913
      %v916 = vadd.f32 %v853, %v914
      %917 = vrot.lane.b32.xlu0 %v487, 127
      %v918 = vpop.permute.xlu0 %917
      %919 = vrot.lane.b32.xlu0 %v488, 127
      %v920 = vpop.permute.xlu0 %919
      %vm921 = vcmp.lt.s32.totalorder %v494, 127
      %v922 = vsel %vm921, %v918, %v920
      %v923 = vsel %vm921, %v920, %v918
      %v924 = vld [vmem:[%s3 + $0x60] sm:$0xc]
      %v925 = vld [vmem:[%s3 + $0x68] sm:$0xc]
      %v928 = vrot.slane %v922, 6
      %v929 = vrot.slane %v923, 6
      %v932 = vmul.f32 %v924, %v928
      %v933 = vmul.f32 %v925, %v929
      %v934 = vadd.f32 %v871, %v932
      %v935 = vadd.f32 %v872, %v933
      %936 = vrot.lane.b32.xlu0 %v487, 126
      %v937 = vpop.permute.xlu0 %936
      %938 = vrot.lane.b32.xlu0 %v488, 126
      %v939 = vpop.permute.xlu0 %938
      %vm940 = vcmp.lt.s32.totalorder %v494, 126
      %v941 = vsel %vm940, %v937, %v939
      %v942 = vsel %vm940, %v939, %v937
      %v943 = vld [vmem:[%s3 + $0x60] sm:$0x30]
      %v944 = vld [vmem:[%s3 + $0x68] sm:$0x30]
      %v947 = vrot.slane %v941, 4
      %v948 = vrot.slane %v942, 4
      %v951 = vmul.f32 %v943, %v947
      %v952 = vmul.f32 %v944, %v948
      %v953 = vadd.f32 %v890, %v951
      %v954 = vadd.f32 %v891, %v952
      %955 = vrot.lane.b32.xlu0 %v487, 125
      %v956 = vpop.permute.xlu0 %955
      %957 = vrot.lane.b32.xlu0 %v488, 125
      %v958 = vpop.permute.xlu0 %957
      %vm959 = vcmp.lt.s32.totalorder %v494, 125
      %v960 = vsel %vm959, %v956, %v958
      %v961 = vsel %vm959, %v958, %v956
      %v962 = vld [vmem:[%s3 + $0x60] sm:$0xc0]
      %v963 = vld [vmem:[%s3 + $0x68] sm:$0xc0]
      %v966 = vrot.slane %v960, 2
      %v967 = vrot.slane %v961, 2
      %v970 = vmul.f32 %v962, %v966
      %v971 = vmul.f32 %v963, %v967
      %v972 = vadd.f32 %v909, %v970
      %v973 = vadd.f32 %v910, %v971
      %974 = vrot.lane.b32.xlu0 %v487, 115
      %v975 = vpop.permute.xlu0 %974
      %976 = vrot.lane.b32.xlu0 %v488, 115
      %v977 = vpop.permute.xlu0 %976
      %vm978 = vcmp.lt.s32.totalorder %v494, 115
      %v979 = vsel %vm978, %v975, %v977
      %v980 = vsel %vm978, %v977, %v975
      %v981 = vld [vmem:[%s3 + $0x70] sm:$0x3]
      %v982 = vld [vmem:[%s3 + $0x78] sm:$0x3]
      %v983 = vmul.f32 %v981, %v979
      %v984 = vmul.f32 %v982, %v980
      %v985 = vadd.f32 %v915, %v983
      %v986 = vadd.f32 %v916, %v984
      %987 = vrot.lane.b32.xlu0 %v487, 114
      %v988 = vpop.permute.xlu0 %987
      %989 = vrot.lane.b32.xlu0 %v488, 114
      %v990 = vpop.permute.xlu0 %989
      %vm991 = vcmp.lt.s32.totalorder %v494, 114
      %v992 = vsel %vm991, %v988, %v990
      %v993 = vsel %vm991, %v990, %v988
      %v994 = vld [vmem:[%s3 + $0x70] sm:$0xc]
      %v995 = vld [vmem:[%s3 + $0x78] sm:$0xc]
      %v998 = vrot.slane %v992, 6
      %v999 = vrot.slane %v993, 6
      %v1002 = vmul.f32 %v994, %v998
      %v1003 = vmul.f32 %v995, %v999
      %v1004 = vadd.f32 %v934, %v1002
      %v1005 = vadd.f32 %v935, %v1003
      %1006 = vrot.lane.b32.xlu0 %v487, 113
      %v1007 = vpop.permute.xlu0 %1006
      %1008 = vrot.lane.b32.xlu0 %v488, 113
      %v1009 = vpop.permute.xlu0 %1008
      %vm1010 = vcmp.lt.s32.totalorder %v494, 113
      %v1011 = vsel %vm1010, %v1007, %v1009
      %v1012 = vsel %vm1010, %v1009, %v1007
      %v1013 = vld [vmem:[%s3 + $0x70] sm:$0x30]
      %v1014 = vld [vmem:[%s3 + $0x78] sm:$0x30]
      %v1017 = vrot.slane %v1011, 4
      %v1018 = vrot.slane %v1012, 4
      %v1021 = vmul.f32 %v1013, %v1017
      %v1022 = vmul.f32 %v1014, %v1018
      %v1023 = vadd.f32 %v953, %v1021
      %v1024 = vadd.f32 %v954, %v1022
      %1025 = vrot.lane.b32.xlu0 %v487, 112
      %v1026 = vpop.permute.xlu0 %1025
      %1027 = vrot.lane.b32.xlu0 %v488, 112
      %v1028 = vpop.permute.xlu0 %1027
      %vm1029 = vcmp.lt.s32.totalorder %v494, 112
      %v1030 = vsel %vm1029, %v1026, %v1028
      %v1031 = vsel %vm1029, %v1028, %v1026
      %v1032 = vld [vmem:[%s3 + $0x70] sm:$0xc0]
      %v1033 = vld [vmem:[%s3 + $0x78] sm:$0xc0]
      %v1036 = vrot.slane %v1030, 2
      %v1037 = vrot.slane %v1031, 2
      %v1040 = vmul.f32 %v1032, %v1036
      %v1041 = vmul.f32 %v1033, %v1037
      %v1042 = vadd.f32 %v972, %v1040
      %v1043 = vadd.f32 %v973, %v1041
      %1044 = vrot.lane.b32.xlu0 %v487, 111
      %v1045 = vpop.permute.xlu0 %1044
      %1046 = vrot.lane.b32.xlu0 %v488, 111
      %v1047 = vpop.permute.xlu0 %1046
      %vm1048 = vcmp.lt.s32.totalorder %v494, 111
      %v1049 = vsel %vm1048, %v1045, %v1047
      %v1050 = vsel %vm1048, %v1047, %v1045
      %v1051 = vld [vmem:[%s3 + $0x80] sm:$0x3]
      %v1052 = vld [vmem:[%s3 + $0x88] sm:$0x3]
      %v1053 = vmul.f32 %v1051, %v1049
      %v1054 = vmul.f32 %v1052, %v1050
      %v1055 = vadd.f32 %v985, %v1053
      %v1056 = vadd.f32 %v986, %v1054
      %1057 = vrot.lane.b32.xlu0 %v487, 110
      %v1058 = vpop.permute.xlu0 %1057
      %1059 = vrot.lane.b32.xlu0 %v488, 110
      %v1060 = vpop.permute.xlu0 %1059
      %vm1061 = vcmp.lt.s32.totalorder %v494, 110
      %v1062 = vsel %vm1061, %v1058, %v1060
      %v1063 = vsel %vm1061, %v1060, %v1058
      %v1064 = vld [vmem:[%s3 + $0x80] sm:$0xc]
      %v1065 = vld [vmem:[%s3 + $0x88] sm:$0xc]
      %v1068 = vrot.slane %v1062, 6
      %v1069 = vrot.slane %v1063, 6
      %v1072 = vmul.f32 %v1064, %v1068
      %v1073 = vmul.f32 %v1065, %v1069
      %v1074 = vadd.f32 %v1004, %v1072
      %v1075 = vadd.f32 %v1005, %v1073
      %1076 = vrot.lane.b32.xlu0 %v487, 109
      %v1077 = vpop.permute.xlu0 %1076
      %1078 = vrot.lane.b32.xlu0 %v488, 109
      %v1079 = vpop.permute.xlu0 %1078
      %vm1080 = vcmp.lt.s32.totalorder %v494, 109
      %v1081 = vsel %vm1080, %v1077, %v1079
      %v1082 = vsel %vm1080, %v1079, %v1077
      %v1083 = vld [vmem:[%s3 + $0x80] sm:$0x30]
      %v1084 = vld [vmem:[%s3 + $0x88] sm:$0x30]
      %v1087 = vrot.slane %v1081, 4
      %v1088 = vrot.slane %v1082, 4
      %v1091 = vmul.f32 %v1083, %v1087
      %v1092 = vmul.f32 %v1084, %v1088
      %v1093 = vadd.f32 %v1023, %v1091
      %v1094 = vadd.f32 %v1024, %v1092
      %1095 = vrot.lane.b32.xlu0 %v487, 99
      %v1096 = vpop.permute.xlu0 %1095
      %1097 = vrot.lane.b32.xlu0 %v488, 99
      %v1098 = vpop.permute.xlu0 %1097
      %vm1099 = vcmp.lt.s32.totalorder %v494, 99
      %v1100 = vsel %vm1099, %v1096, %v1098
      %v1101 = vsel %vm1099, %v1098, %v1096
      %v1102 = vld [vmem:[%s3 + $0x80] sm:$0xc0]
      %v1103 = vld [vmem:[%s3 + $0x88] sm:$0xc0]
      %v1106 = vrot.slane %v1100, 2
      %v1107 = vrot.slane %v1101, 2
      %v1110 = vmul.f32 %v1102, %v1106
      %v1111 = vmul.f32 %v1103, %v1107
      %v1112 = vadd.f32 %v1042, %v1110
      %v1113 = vadd.f32 %v1043, %v1111
      %1114 = vrot.lane.b32.xlu0 %v487, 98
      %v1115 = vpop.permute.xlu0 %1114
      %1116 = vrot.lane.b32.xlu0 %v488, 98
      %v1117 = vpop.permute.xlu0 %1116
      %vm1118 = vcmp.lt.s32.totalorder %v494, 98
      %v1119 = vsel %vm1118, %v1115, %v1117
      %v1120 = vsel %vm1118, %v1117, %v1115
      %v1121 = vld [vmem:[%s3 + $0x90] sm:$0x3]
      %v1122 = vld [vmem:[%s3 + $0x98] sm:$0x3]
      %v1123 = vmul.f32 %v1121, %v1119
      %v1124 = vmul.f32 %v1122, %v1120
      %v1125 = vadd.f32 %v1055, %v1123
      %v1126 = vadd.f32 %v1056, %v1124
      %1127 = vrot.lane.b32.xlu0 %v487, 97
      %v1128 = vpop.permute.xlu0 %1127
      %1129 = vrot.lane.b32.xlu0 %v488, 97
      %v1130 = vpop.permute.xlu0 %1129
      %vm1131 = vcmp.lt.s32.totalorder %v494, 97
      %v1132 = vsel %vm1131, %v1128, %v1130
      %v1133 = vsel %vm1131, %v1130, %v1128
      %v1134 = vld [vmem:[%s3 + $0x90] sm:$0xc]
      %v1135 = vld [vmem:[%s3 + $0x98] sm:$0xc]
      %v1138 = vrot.slane %v1132, 6
      %v1139 = vrot.slane %v1133, 6
      %v1142 = vmul.f32 %v1134, %v1138
      %v1143 = vmul.f32 %v1135, %v1139
      %v1144 = vadd.f32 %v1074, %v1142
      %v1145 = vadd.f32 %v1075, %v1143
      %1146 = vrot.lane.b32.xlu0 %v487, 96
      %v1147 = vpop.permute.xlu0 %1146
      %1148 = vrot.lane.b32.xlu0 %v488, 96
      %v1149 = vpop.permute.xlu0 %1148
      %vm1150 = vcmp.lt.s32.totalorder %v494, 96
      %v1151 = vsel %vm1150, %v1147, %v1149
      %v1152 = vsel %vm1150, %v1149, %v1147
      %v1153 = vld [vmem:[%s3 + $0x90] sm:$0x30]
      %v1154 = vld [vmem:[%s3 + $0x98] sm:$0x30]
      %v1157 = vrot.slane %v1151, 4
      %v1158 = vrot.slane %v1152, 4
      %v1161 = vmul.f32 %v1153, %v1157
      %v1162 = vmul.f32 %v1154, %v1158
      %v1163 = vadd.f32 %v1093, %v1161
      %v1164 = vadd.f32 %v1094, %v1162
      %1165 = vrot.lane.b32.xlu0 %v487, 95
      %v1166 = vpop.permute.xlu0 %1165
      %1167 = vrot.lane.b32.xlu0 %v488, 95
      %v1168 = vpop.permute.xlu0 %1167
      %vm1169 = vcmp.lt.s32.totalorder %v494, 95
      %v1170 = vsel %vm1169, %v1166, %v1168
      %v1171 = vsel %vm1169, %v1168, %v1166
      %v1172 = vld [vmem:[%s3 + $0x90] sm:$0xc0]
      %v1173 = vld [vmem:[%s3 + $0x98] sm:$0xc0]
      %v1176 = vrot.slane %v1170, 2
      %v1177 = vrot.slane %v1171, 2
      %v1180 = vmul.f32 %v1172, %v1176
      %v1181 = vmul.f32 %v1173, %v1177
      %v1182 = vadd.f32 %v1112, %v1180
      %v1183 = vadd.f32 %v1113, %v1181
      %1184 = vrot.lane.b32.xlu0 %v487, 94
      %v1185 = vpop.permute.xlu0 %1184
      %1186 = vrot.lane.b32.xlu0 %v488, 94
      %v1187 = vpop.permute.xlu0 %1186
      %vm1188 = vcmp.lt.s32.totalorder %v494, 94
      %v1189 = vsel %vm1188, %v1185, %v1187
      %v1190 = vsel %vm1188, %v1187, %v1185
      %v1191 = vld [vmem:[%s3 + $0xa0] sm:$0x3]
      %v1192 = vld [vmem:[%s3 + $0xa8] sm:$0x3]
      %v1193 = vmul.f32 %v1191, %v1189
      %v1194 = vmul.f32 %v1192, %v1190
      %v1195 = vadd.f32 %v1125, %v1193
      %v1196 = vadd.f32 %v1126, %v1194
      %1197 = vrot.lane.b32.xlu0 %v487, 93
      %v1198 = vpop.permute.xlu0 %1197
      %1199 = vrot.lane.b32.xlu0 %v488, 93
      %v1200 = vpop.permute.xlu0 %1199
      %vm1201 = vcmp.lt.s32.totalorder %v494, 93
      %v1202 = vsel %vm1201, %v1198, %v1200
      %v1203 = vsel %vm1201, %v1200, %v1198
      %v1204 = vld [vmem:[%s3 + $0xa0] sm:$0xc]
      %v1205 = vld [vmem:[%s3 + $0xa8] sm:$0xc]
      %v1208 = vrot.slane %v1202, 6
      %v1209 = vrot.slane %v1203, 6
      %v1212 = vmul.f32 %v1204, %v1208
      %v1213 = vmul.f32 %v1205, %v1209
      %v1214 = vadd.f32 %v1144, %v1212
      %v1215 = vadd.f32 %v1145, %v1213
      %1216 = vrot.lane.b32.xlu0 %v487, 83
      %v1217 = vpop.permute.xlu0 %1216
      %1218 = vrot.lane.b32.xlu0 %v488, 83
      %v1219 = vpop.permute.xlu0 %1218
      %vm1220 = vcmp.lt.s32.totalorder %v494, 83
      %v1221 = vsel %vm1220, %v1217, %v1219
      %v1222 = vsel %vm1220, %v1219, %v1217
      %v1223 = vld [vmem:[%s3 + $0xa0] sm:$0x30]
      %v1224 = vld [vmem:[%s3 + $0xa8] sm:$0x30]
      %v1227 = vrot.slane %v1221, 4
      %v1228 = vrot.slane %v1222, 4
      %v1231 = vmul.f32 %v1223, %v1227
      %v1232 = vmul.f32 %v1224, %v1228
      %v1233 = vadd.f32 %v1163, %v1231
      %v1234 = vadd.f32 %v1164, %v1232
      %1235 = vrot.lane.b32.xlu0 %v487, 82
      %v1236 = vpop.permute.xlu0 %1235
      %1237 = vrot.lane.b32.xlu0 %v488, 82
      %v1238 = vpop.permute.xlu0 %1237
      %vm1239 = vcmp.lt.s32.totalorder %v494, 82
      %v1240 = vsel %vm1239, %v1236, %v1238
      %v1241 = vsel %vm1239, %v1238, %v1236
      %v1242 = vld [vmem:[%s3 + $0xa0] sm:$0xc0]
      %v1243 = vld [vmem:[%s3 + $0xa8] sm:$0xc0]
      %v1246 = vrot.slane %v1240, 2
      %v1247 = vrot.slane %v1241, 2
      %v1250 = vmul.f32 %v1242, %v1246
      %v1251 = vmul.f32 %v1243, %v1247
      %v1252 = vadd.f32 %v1182, %v1250
      %v1253 = vadd.f32 %v1183, %v1251
      %1254 = vrot.lane.b32.xlu0 %v487, 81
      %v1255 = vpop.permute.xlu0 %1254
      %1256 = vrot.lane.b32.xlu0 %v488, 81
      %v1257 = vpop.permute.xlu0 %1256
      %vm1258 = vcmp.lt.s32.totalorder %v494, 81
      %v1259 = vsel %vm1258, %v1255, %v1257
      %v1260 = vsel %vm1258, %v1257, %v1255
      %v1261 = vld [vmem:[%s3 + $0xb0] sm:$0x3]
      %v1262 = vld [vmem:[%s3 + $0xb8] sm:$0x3]
      %v1263 = vmul.f32 %v1261, %v1259
      %v1264 = vmul.f32 %v1262, %v1260
      %v1265 = vadd.f32 %v1195, %v1263
      %v1266 = vadd.f32 %v1196, %v1264
      %1267 = vrot.lane.b32.xlu0 %v487, 80
      %v1268 = vpop.permute.xlu0 %1267
      %1269 = vrot.lane.b32.xlu0 %v488, 80
      %v1270 = vpop.permute.xlu0 %1269
      %vm1271 = vcmp.lt.s32.totalorder %v494, 80
      %v1272 = vsel %vm1271, %v1268, %v1270
      %v1273 = vsel %vm1271, %v1270, %v1268
      %v1274 = vld [vmem:[%s3 + $0xb0] sm:$0xc]
      %v1275 = vld [vmem:[%s3 + $0xb8] sm:$0xc]
      %v1278 = vrot.slane %v1272, 6
      %v1279 = vrot.slane %v1273, 6
      %v1282 = vmul.f32 %v1274, %v1278
      %v1283 = vmul.f32 %v1275, %v1279
      %v1284 = vadd.f32 %v1214, %v1282
      %v1285 = vadd.f32 %v1215, %v1283
      %1286 = vrot.lane.b32.xlu0 %v487, 79
      %v1287 = vpop.permute.xlu0 %1286
      %1288 = vrot.lane.b32.xlu0 %v488, 79
      %v1289 = vpop.permute.xlu0 %1288
      %vm1290 = vcmp.lt.s32.totalorder %v494, 79
      %v1291 = vsel %vm1290, %v1287, %v1289
      %v1292 = vsel %vm1290, %v1289, %v1287
      %v1293 = vld [vmem:[%s3 + $0xb0] sm:$0x30]
      %v1294 = vld [vmem:[%s3 + $0xb8] sm:$0x30]
      %v1297 = vrot.slane %v1291, 4
      %v1298 = vrot.slane %v1292, 4
      %v1301 = vmul.f32 %v1293, %v1297
      %v1302 = vmul.f32 %v1294, %v1298
      %v1303 = vadd.f32 %v1233, %v1301
      %v1304 = vadd.f32 %v1234, %v1302
      %1305 = vrot.lane.b32.xlu0 %v487, 78
      %v1306 = vpop.permute.xlu0 %1305
      %1307 = vrot.lane.b32.xlu0 %v488, 78
      %v1308 = vpop.permute.xlu0 %1307
      %vm1309 = vcmp.lt.s32.totalorder %v494, 78
      %v1310 = vsel %vm1309, %v1306, %v1308
      %v1311 = vsel %vm1309, %v1308, %v1306
      %v1312 = vld [vmem:[%s3 + $0xb0] sm:$0xc0]
      %v1313 = vld [vmem:[%s3 + $0xb8] sm:$0xc0]
      %v1316 = vrot.slane %v1310, 2
      %v1317 = vrot.slane %v1311, 2
      %v1320 = vmul.f32 %v1312, %v1316
      %v1321 = vmul.f32 %v1313, %v1317
      %v1322 = vadd.f32 %v1252, %v1320
      %v1323 = vadd.f32 %v1253, %v1321
      %1324 = vrot.lane.b32.xlu0 %v487, 77
      %v1325 = vpop.permute.xlu0 %1324
      %1326 = vrot.lane.b32.xlu0 %v488, 77
      %v1327 = vpop.permute.xlu0 %1326
      %vm1328 = vcmp.lt.s32.totalorder %v494, 77
      %v1329 = vsel %vm1328, %v1325, %v1327
      %v1330 = vsel %vm1328, %v1327, %v1325
      %v1331 = vld [vmem:[%s3 + $0xc0] sm:$0x3]
      %v1332 = vld [vmem:[%s3 + $0xc8] sm:$0x3]
      %v1333 = vmul.f32 %v1331, %v1329
      %v1334 = vmul.f32 %v1332, %v1330
      %v1335 = vadd.f32 %v1265, %v1333
      %v1336 = vadd.f32 %v1266, %v1334
      %v1339 = vrot.slane %v1284, 2
      %v1340 = vrot.slane %v1285, 2
      %v1343 = vadd.f32 %v1335, %v1339
      %v1344 = vadd.f32 %v1336, %v1340
      %v1347 = vrot.slane %v1322, 2
      %v1348 = vrot.slane %v1323, 2
      %v1351 = vadd.f32 %v1303, %v1347
      %v1352 = vadd.f32 %v1304, %v1348
      %v1355 = vrot.slane %v1351, 4
      %v1356 = vrot.slane %v1352, 4
      %v1359 = vadd.f32 %v1343, %v1355
      %v1360 = vadd.f32 %v1344, %v1356
      %v1363 = vrot.slane %v1359, 1
      %v1364 = vrot.slane %v1360, 1
      %v1367 = vadd.f32 %v1359, %v1363
      %v1368 = vadd.f32 %v1360, %v1364
      %v1369 = vxor.u32 %v1367, 2147483648
      %v1370 = vxor.u32 %v1368, 2147483648
      %v1371 = vmul.f32 %v1369, 1.442695
      %v1372 = vpow.pop %v1371
      %v1373 = vmul.f32 %v1370, 1.442695
      %v1374 = vpow.pop %v1373
      %v1375 = vadd.f32 %v1372, 1.0
      %v1376 = vadd.f32 %v1374, 1.0
      %v1377 = vrcp.pop %v1375
      %v1378 = vmul.f32 1.0, %v1377
      %v1379 = vrcp.pop %v1376
      %v1380 = vmul.f32 1.0, %v1379
      %v1381 = vlaneseq
      %v1382 = vshrl.u32 %v1381, 7
      %v1383 = vsub.s32 0, %v1382
      %v1384 = vrot.slane %v1378, %v1383
      %v1385 = vlaneseq
      %v1386 = vshrl.u32 %v1385, 7
      %v1387 = vsub.s32 0, %v1386
      %v1388 = vrot.slane %v1380, %v1387
      %v1389 = vmul.f32 %v440, %v1384
      %v1390 = vmul.f32 %v441, %v1388
      %v1391 = vmul.f32 %v442, %v1384
      %v1392 = vmul.f32 %v443, %v1388
      %v1393 = vmul.f32 %v444, %v1384
      %v1394 = vmul.f32 %v445, %v1388
      %v1395 = vmul.f32 %v446, %v1384
      %v1396 = vmul.f32 %v447, %v1388
      %1397 = vst [vmem:[%s197] sm:$0xff] %v1389
      %1398 = vst [vmem:[%s197 + $0x8] sm:$0xff] %v1390
      %1399 = vst [vmem:[%s197 + $0x10] sm:$0xff] %v1391
      %1400 = vst [vmem:[%s197 + $0x18] sm:$0xff] %v1392
      %1401 = vst [vmem:[%s197 + $0x20] sm:$0xff] %v1393
      %1402 = vst [vmem:[%s197 + $0x28] sm:$0xff] %v1394
      %1403 = vst [vmem:[%s197 + $0x30] sm:$0xff] %v1395
      %1404 = vst [vmem:[%s197 + $0x38] sm:$0xff] %v1396
      %p1405 = scmp.lt.s32.totalorder %s15, 1
      %s1406 = scalar_select %p1405, %s15, 1
      %s1407 = smul.addr %s1406, 8
      %s1408 = smul.addr %s1407, 8
      %s1409 = scalar_lea.vmem %s4, %s1408
      // Predicated region
      $region37: #{cbam_forward.1} parent=35 // pred_check
        %p1410 = pneg %p122
      $region38: #{cbam_forward.1} parent=35 // pred_check_branch
        %1412 = sbr.rel (%p1410) target = $region40
      $region39: #{cbam_forward.1} parent=35 // pred_region
        _
      $region40: #{cbam_forward.1} parent=35 // pred_fallthru
        _
    $region36: #{cbam_forward.1} parent=5 // pred_fallthru
      _
    %p1413 = scmp.le.s32.totalorder 2, %s10
    // Predicated region
    $region41: #{cbam_forward.1} parent=5 // pred_check
      %p1414 = pneg %p1413
    $region42: #{cbam_forward.1} parent=5 // pred_check_branch
      %1416 = sbr.rel (%p1414) target = $region44
    $region43: #{cbam_forward.1} parent=5 // pred_region
      %s1417 = ssub.s32 %s10, 2
      // Predicated region
      $region45: #{cbam_forward.1} parent=43 // pred_check
        %p1418 = pneg %p128
      $region46: #{cbam_forward.1} parent=43 // pred_check_branch
        %1420 = sbr.rel (%p1418) target = $region48
      $region47: #{cbam_forward.1} parent=43 // pred_region
        %p1421 = scmp.lt.s32.totalorder %s16, 1
        %s1422 = scalar_select %p1421, %s16, 1
        %s1423 = smul.addr %s1422, 8
        %s1424 = smul.addr %s1423, 8
        %s1425 = scalar_lea.vmem %s4, %s1424
      $region48: #{cbam_forward.1} parent=43 // pred_fallthru
        _
    $region44: #{cbam_forward.1} parent=5 // pred_fallthru
      _
  $region6: #{cbam_forward.1} parent=0 // loop_footer
    %s14 = sadd.s32 1, %s10
  $region7: #{cbam_forward.1} parent=0 // loop_footer_branch
    %9 = sbr.rel target = $region3
  $region8: #{cbam_forward.1} parent=0 // loop_exit
    _

</llo_original>
